<compile_context>
chip_gen: v6e
topology: v6e:2x2x1
jax: 0.10.0
libtpu: 0.0.40
codegen_flags: <defaults>
</compile_context>

<pallas_src>
import functools

import jax
import jax.numpy as jnp
from jax.experimental import pallas as pl
from jax.experimental.pallas import tpu as pltpu


_HEAD_SPECS = (("nocs", 3), ("seg_mask", 1), ("nocs_uncertainty", 1))
_COUT = sum(c for _, c in _HEAD_SPECS)      # 5 real output channels
_COUT_PAD = 8                               # pad to 8 sublanes -> unmasked stores
_MARGIN = 128                               # lane-aligned halo for tap slices


# ---------------------------------------------------------------------------
# Pallas kernel: fused (3x3 conv + bias + ReLU) -> (block-diagonal 1x1 conv)
# for a batch tile, in channels-on-sublanes / spatial-on-lanes layout.
# ---------------------------------------------------------------------------
def _fused_heads_kernel(x_ref, w1_ref, b1_ref, w2_ref, b2_ref, out_ref,
                        *, H, W, Bt):
    # x_ref : (Bt, Cin, H*W)        f32   unpadded, row-flattened images
    # w1_ref: (Chid, 9*Cin)         bf16  3x3 weights, tap-major / chan-minor cols
    # b1_ref: (Chid, 1)             f32
    # w2_ref: (Cout_pad, Chid)      f32   block-diagonal 1x1 projection (zero rows pad)
    # b2_ref: (Cout_pad, 1)         f32
    # out_ref: (Bt, Cout_pad, H*W)  f32
    hw = H * W
    ncols = Bt * hw

    # Fold the batch tile into the matmul N axis (images concatenated on lanes).
    if Bt == 1:
        x_all = x_ref[0]
    else:
        x_all = jnp.concatenate([x_ref[b] for b in range(Bt)], axis=1)
    x_bf = x_all.astype(jnp.bfloat16)                         # (Cin, ncols)

    # Halo buffer so every 3x3 tap is a static lane slice; taps that fall
    # outside their own image are zeroed with masks below.  This replaces the
    # wrapper-side jnp.pad of the previous version (no extra HBM pass).
    cin = x_bf.shape[0]
    zpad = jnp.zeros((cin, _MARGIN), jnp.bfloat16)
    xbuf = jnp.concatenate([zpad, x_bf, zpad], axis=1)        # (Cin, ncols + 2*MARGIN)

    # Per-pixel position helpers (position within its image / within its row).
    p = jax.lax.broadcasted_iota(jnp.int32, (1, ncols), 1) % hw
    c = p % W

    taps = []
    for dy in range(3):
        for dx in range(3):
            oy, ox = dy - 1, dx - 1
            off = oy * W + ox
            tap = xbuf[:, _MARGIN + off:_MARGIN + off + ncols]  # (Cin, ncols)
            conds = []
            if oy < 0:
                conds.append(p >= (-oy) * W)           # row r + oy >= 0
            elif oy > 0:
                conds.append(p < (H - oy) * W)         # row r + oy <  H
            if ox < 0:
                conds.append(c >= -ox)                 # col c + ox >= 0
            elif ox > 0:
                conds.append(c < W - ox)               # col c + ox <  W
            if conds:
                m = conds[0]
                for extra in conds[1:]:
                    m = jnp.logical_and(m, extra)
                tap = jnp.where(m, tap, jnp.zeros((), jnp.bfloat16))
            taps.append(tap)
    xcat = jnp.concatenate(taps, axis=0)                      # (9*Cin, ncols)

    # Single K = 9*Cin MXU matmul for all three heads; bf16 operands, f32 acc.
    hid = jnp.dot(w1_ref[...], xcat, preferred_element_type=jnp.float32)
    hid = jnp.maximum(hid + b1_ref[...], 0.0)                 # f32 bias + ReLU (VPU)

    # Fused block-diagonal 1x1 projection of all heads (tiny, stays f32).
    out = jnp.dot(w2_ref[...], hid,
                  preferred_element_type=jnp.float32) + b2_ref[...]

    # Lane-dense, full-sublane stores (hw multiple of 128, Cout_pad == 8).
    for b in range(Bt):
        out_ref[b] = out[:, b * hw:(b + 1) * hw]


def _fused_heads_pallas(x_flat, w1t, b1t, w2t, b2t, *, H, W, batch_tile):
    """x_flat: (B, Cin, H*W) f32 -> (B, Cout_pad, H*W) f32."""
    B, Cin, HW = x_flat.shape
    Chid = w1t.shape[0]
    Bt = batch_tile
    assert B % Bt == 0, (B, Bt)
    assert W + 1 <= _MARGIN

    kernel = functools.partial(_fused_heads_kernel, H=H, W=W, Bt=Bt)

    flops = 2 * B * HW * Chid * (9 * Cin + _COUT_PAD)
    bytes_accessed = (x_flat.size * x_flat.dtype.itemsize
                      + B * _COUT_PAD * HW * 4
                      + w1t.size * 2 + b1t.size * 4
                      + w2t.size * 4 + b2t.size * 4)

    return pl.pallas_call(
        kernel,
        out_shape=jax.ShapeDtypeStruct((B, _COUT_PAD, HW), jnp.float32),
        grid_spec=pltpu.PrefetchScalarGridSpec(
            num_scalar_prefetch=0,
            grid=(B // Bt,),
            in_specs=[
                pl.BlockSpec((Bt, Cin, HW), lambda i: (i, 0, 0)),
                pl.BlockSpec((Chid, 9 * Cin), lambda i: (0, 0)),
                pl.BlockSpec((Chid, 1), lambda i: (0, 0)),
                pl.BlockSpec((_COUT_PAD, Chid), lambda i: (0, 0)),
                pl.BlockSpec((_COUT_PAD, 1), lambda i: (0, 0)),
            ],
            out_specs=pl.BlockSpec((Bt, _COUT_PAD, HW), lambda i: (i, 0, 0)),
        ),
        compiler_params=pltpu.CompilerParams(
            dimension_semantics=("parallel",)),
        cost_estimate=pl.CostEstimate(flops=flops, transcendentals=0,
                                      bytes_accessed=bytes_accessed),
    )(x_flat, w1t, b1t, w2t, b2t)


# ---------------------------------------------------------------------------
# NocsHead parameters, one-time fusion, and the forward wrapper
# ---------------------------------------------------------------------------
def init_nocs_head_params(key, input_channel=32, conv_channel=32):
    """Deterministic synthetic params for the three SingleHeads (HWIO conv1)."""
    keys = jax.random.split(key, 4 * len(_HEAD_SPECS))
    params = {}
    ki = 0
    for name, cout in _HEAD_SPECS:
        s1 = 1.0 / jnp.sqrt(9.0 * input_channel)
        s2 = 1.0 / jnp.sqrt(1.0 * conv_channel)
        params[name] = {
            "w1": jax.random.normal(keys[ki + 0],
                                    (3, 3, input_channel, conv_channel),
                                    jnp.float32) * s1,
            "b1": jax.random.normal(keys[ki + 1], (conv_channel,),
                                    jnp.float32) * s1,
            "w2": jax.random.normal(keys[ki + 2], (conv_channel, cout),
                                    jnp.float32) * s2,
            "b2": jax.random.normal(keys[ki + 3], (cout,),
                                    jnp.float32) * s2,
        }
        ki += 4
    return params


def fuse_nocs_head_params(params, input_channel=32, conv_channel=32):
    """One-time parameter fusion (hoisted out of the per-step forward pass)."""
    Cc = conv_channel
    Chid = Cc * len(_HEAD_SPECS)

    # 3x3 weights: concat heads on the hidden axis, laid out (Chid, 9*Cin) with
    # columns tap-major / channel-minor to match the in-kernel tap stacking.
    w1 = jnp.concatenate([params[n]["w1"] for n, _ in _HEAD_SPECS], axis=-1)
    w1t = (w1.reshape(9, input_channel, Chid)
              .transpose(2, 0, 1)
              .reshape(Chid, 9 * input_channel))
    b1t = jnp.concatenate([params[n]["b1"] for n, _ in _HEAD_SPECS]).reshape(Chid, 1)

    # 1x1 weights: block-diagonal, padded to 8 rows for full-sublane stores.
    w2t = jnp.zeros((_COUT_PAD, Chid), jnp.float32)
    b2t = jnp.zeros((_COUT_PAD,), jnp.float32)
    row = 0
    for i, (n, cout) in enumerate(_HEAD_SPECS):
        w2t = w2t.at[row:row + cout, i * Cc:(i + 1) * Cc].set(params[n]["w2"].T)
        b2t = b2t.at[row:row + cout].set(params[n]["b2"])
        row += cout

    return {
        "w1t": w1t.astype(jnp.bfloat16),
        "b1t": b1t.astype(jnp.float32),
        "w2t": w2t,
        "b2t": b2t.reshape(_COUT_PAD, 1),
    }


def _pick_batch_tile(B, hw):
    """Divisor of B giving >= 512 matmul columns per grid step (when possible)."""
    bt = min(B, max(1, pl.cdiv(512, hw)))
    while B % bt:
        bt -= 1
    return max(bt, 1)


def nocs_head_forward(x_nchw, fused_params, *, tanh_activate=False,
                      batch_tile=None):
    """Equivalent of NocsHead.forward. Input/outputs are NCHW like PyTorch."""
    B, Cin, H, W = x_nchw.shape
    hw = H * W
    if batch_tile is None:
        batch_tile = _pick_batch_tile(B, hw)

    # Reshape only (free on contiguous NCHW); pad + bf16 cast happen in-kernel.
    x_flat = x_nchw.reshape(B, Cin, hw)

    out = _fused_heads_pallas(x_flat,
                              fused_params["w1t"], fused_params["b1t"],
                              fused_params["w2t"], fused_params["b2t"],
                              H=H, W=W, batch_tile=batch_tile)
    out = out.reshape(B, _COUT_PAD, H, W)

    nocs = out[:, 0:3]
    if tanh_activate:
        nocs = jnp.tanh(nocs)
    return {
        "nocs": nocs,                                           # (B, 3, H, W)
        "seg_mask": out[:, 3:4],                                # (B, 1, H, W)
        "nocs_uncertainty": out[:, 4:5],                        # (B, 1, H, W)
    }


# ---------------------------------------------------------------------------
# Pure-JAX references (for correctness check)
# ---------------------------------------------------------------------------
def _ref_single_head(x_nchw, p, *, mxu_bf16):
    if mxu_bf16:                       # same MXU numerics as the kernel
        xc, w1 = x_nchw.astype(jnp.bfloat16), p["w1"].astype(jnp.bfloat16)
    else:                              # pure f32
        xc, w1 = x_nchw, p["w1"]
    y = jax.lax.conv_general_dilated(
        xc, w1, (1, 1), "SAME",
        dimension_numbers=("NCHW", "HWIO", "NCHW"),
        preferred_element_type=jnp.float32)
    y = jnp.maximum(y + p["b1"][None, :, None, None], 0.0)
    return jnp.einsum("bchw,cd->bdhw", y, p["w2"]) + p["b2"][None, :, None, None]


def nocs_head_reference(x_nchw, params, *, tanh_activate=False, mxu_bf16=False):
    nocs = _ref_single_head(x_nchw, params["nocs"], mxu_bf16=mxu_bf16)
    if tanh_activate:
        nocs = jnp.tanh(nocs)
    return {
        "nocs": nocs,
        "seg_mask": _ref_single_head(x_nchw, params["seg_mask"],
                                     mxu_bf16=mxu_bf16),
        "nocs_uncertainty": _ref_single_head(x_nchw, params["nocs_uncertainty"],
                                             mxu_bf16=mxu_bf16),
    }


if __name__ == "__main__":
    B, Cin, H, W = 2, 32, 16, 16
    conv_channel = 32

    key = jax.random.PRNGKey(0)
    kx, kp = jax.random.split(key)
    x = jax.random.normal(kx, (B, Cin, H, W), jnp.float32)
    params = init_nocs_head_params(kp, input_channel=Cin,
                                   conv_channel=conv_channel)

    # One-time parameter fusion (hoisted out of the forward hot path).
    fused = fuse_nocs_head_params(params, input_channel=Cin,
                                  conv_channel=conv_channel)
    fused = jax.tree_util.tree_map(jnp.asarray, fused)

    fwd = jax.jit(functools.partial(nocs_head_forward, tanh_activate=False))
    preds = fwd(x, fused)
    jax.block_until_ready(preds)

    # Tight check against a reference with matching MXU numerics
    # (bf16 conv operands, f32 accumulation), plus a looser sanity check
    # against the pure-f32 reference (differences = bf16 operand rounding only).
    ref_mx = nocs_head_reference(x, params, mxu_bf16=True)
    ref_f32 = nocs_head_reference(x, params, mxu_bf16=False)

    for k in ("nocs", "seg_mask", "nocs_uncertainty"):
        assert preds[k].shape == ref_f32[k].shape, (k, preds[k].shape,
                                                    ref_f32[k].shape)
        assert jnp.allclose(preds[k], ref_mx[k], atol=2e-3, rtol=2e-3), k
        assert jnp.allclose(preds[k], ref_f32[k], atol=5e-2, rtol=5e-2), k

    print("KERNEL_OK")
</pallas_src>

<mosaic_0001>
module attributes {stable_mosaic.version = 11 : i64} {
  func.func @_fused_heads_kernel(%arg0: i32, %arg1: memref<2x32x256xf32, #tpu.memory_space<vmem>>, %arg2: memref<96x288xbf16, #tpu.memory_space<vmem>>, %arg3: memref<96x1xf32, #tpu.memory_space<vmem>>, %arg4: memref<8x96xf32, #tpu.memory_space<vmem>>, %arg5: memref<8x1xf32, #tpu.memory_space<vmem>>, %arg6: memref<2x8x256xf32, #tpu.memory_space<vmem>>) attributes {dimension_semantics = [#tpu.dimension_semantics<parallel>], iteration_bounds = array<i64: 1>, scalar_prefetch = 0 : i64, scratch_operands = 0 : i64, tpu.core_type = #tpu.core_type<tc>, window_params = [{transform_indices = @transform_0, window_bounds = array<i64: 2, 32, 256>}, {pipeline_mode = #tpu.pipeline_mode<synchronous>, transform_indices = @transform_1, window_bounds = array<i64: 96, 288>}, {pipeline_mode = #tpu.pipeline_mode<synchronous>, transform_indices = @transform_2, window_bounds = array<i64: 96, 1>}, {pipeline_mode = #tpu.pipeline_mode<synchronous>, transform_indices = @transform_3, window_bounds = array<i64: 8, 96>}, {pipeline_mode = #tpu.pipeline_mode<synchronous>, transform_indices = @transform_4, window_bounds = array<i64: 8, 1>}, {transform_indices = @transform_5, window_bounds = array<i64: 2, 8, 256>}]} {
    %c0 = arith.constant 0 : index
    %c0_0 = arith.constant 0 : index
    %c0_1 = arith.constant 0 : index
    %0 = vector.load %arg1[%c0, %c0_0, %c0_1] : memref<2x32x256xf32, #tpu.memory_space<vmem>>, vector<1x32x256xf32>
    %1 = vector.shape_cast %0 : vector<1x32x256xf32> to vector<32x256xf32>
    %c1 = arith.constant 1 : index
    %c0_2 = arith.constant 0 : index
    %c0_3 = arith.constant 0 : index
    %2 = vector.load %arg1[%c1, %c0_2, %c0_3] : memref<2x32x256xf32, #tpu.memory_space<vmem>>, vector<1x32x256xf32>
    %3 = vector.shape_cast %2 : vector<1x32x256xf32> to vector<32x256xf32>
    %4 = tpu.concatenate %1, %3 in 1 : vector<32x256xf32>, vector<32x256xf32> -> vector<32x512xf32>
    %5 = arith.truncf %4 : vector<32x512xf32> to vector<32x512xbf16>
    %cst = arith.constant 0.000000e+00 : bf16
    %6 = vector.broadcast %cst : bf16 to vector<32x128xbf16>
    %7 = tpu.concatenate %6, %5, %6 in 1 : vector<32x128xbf16>, vector<32x512xbf16>, vector<32x128xbf16> -> vector<32x768xbf16>
    %8 = tpu.iota {dimensions = array<i32: 1>} : vector<1x512xi32>
    %c256_i32 = arith.constant 256 : i32
    %c0_i32 = arith.constant 0 : i32
    %9 = arith.cmpi eq, %c256_i32, %c0_i32 : i32
    %c1_i32 = arith.constant 1 : i32
    %10 = arith.select %9, %c1_i32, %c256_i32 : i32
    %11 = vector.broadcast %10 : i32 to vector<1x512xi32>
    %12 = arith.remsi %8, %11 : vector<1x512xi32>
    %c0_i32_4 = arith.constant 0 : i32
    %13 = vector.broadcast %c0_i32_4 : i32 to vector<1x512xi32>
    %14 = arith.cmpi ne, %12, %13 : vector<1x512xi32>
    %c0_i32_5 = arith.constant 0 : i32
    %15 = vector.broadcast %c0_i32_5 : i32 to vector<1x512xi32>
    %16 = arith.cmpi slt, %12, %15 : vector<1x512xi32>
    %c0_i32_6 = arith.constant 0 : i32
    %17 = arith.cmpi slt, %10, %c0_i32_6 : i32
    %18 = vector.broadcast %17 : i1 to vector<1x512xi1>
    %19 = vector.broadcast %18 : vector<1x512xi1> to vector<1x512xi1>
    %20 = arith.xori %16, %19 : vector<1x512xi1>
    %21 = arith.andi %20, %14 : vector<1x512xi1>
    %22 = vector.broadcast %10 : i32 to vector<1x512xi32>
    %23 = arith.addi %12, %22 : vector<1x512xi32>
    %24 = arith.select %21, %23, %12 : vector<1x512xi1>, vector<1x512xi32>
    %c16_i32 = arith.constant 16 : i32
    %c0_i32_7 = arith.constant 0 : i32
    %25 = arith.cmpi eq, %c16_i32, %c0_i32_7 : i32
    %c1_i32_8 = arith.constant 1 : i32
    %26 = arith.select %25, %c1_i32_8, %c16_i32 : i32
    %27 = vector.broadcast %26 : i32 to vector<1x512xi32>
    %28 = arith.remsi %24, %27 : vector<1x512xi32>
    %c0_i32_9 = arith.constant 0 : i32
    %29 = vector.broadcast %c0_i32_9 : i32 to vector<1x512xi32>
    %30 = arith.cmpi ne, %28, %29 : vector<1x512xi32>
    %c0_i32_10 = arith.constant 0 : i32
    %31 = vector.broadcast %c0_i32_10 : i32 to vector<1x512xi32>
    %32 = arith.cmpi slt, %28, %31 : vector<1x512xi32>
    %c0_i32_11 = arith.constant 0 : i32
    %33 = arith.cmpi slt, %26, %c0_i32_11 : i32
    %34 = vector.broadcast %33 : i1 to vector<1x512xi1>
    %35 = vector.broadcast %34 : vector<1x512xi1> to vector<1x512xi1>
    %36 = arith.xori %32, %35 : vector<1x512xi1>
    %37 = arith.andi %36, %30 : vector<1x512xi1>
    %38 = vector.broadcast %26 : i32 to vector<1x512xi32>
    %39 = arith.addi %28, %38 : vector<1x512xi32>
    %40 = arith.select %37, %39, %28 : vector<1x512xi1>, vector<1x512xi32>
    %41 = vector.extract_strided_slice %7 {offsets = [0, 111], sizes = [32, 512], strides = [1, 1]} : vector<32x768xbf16> to vector<32x512xbf16>
    %c16_i32_12 = arith.constant 16 : i32
    %42 = vector.broadcast %c16_i32_12 : i32 to vector<1x512xi32>
    %43 = arith.cmpi sge, %24, %42 : vector<1x512xi32>
    %c1_i32_13 = arith.constant 1 : i32
    %44 = vector.broadcast %c1_i32_13 : i32 to vector<1x512xi32>
    %45 = arith.cmpi sge, %40, %44 : vector<1x512xi32>
    %46 = arith.andi %43, %45 : vector<1x512xi1>
    %cst_14 = arith.constant 0.000000e+00 : bf16
    %47 = vector.shape_cast %46 : vector<1x512xi1> to vector<1x512xi1>
    %48 = vector.broadcast %47 : vector<1x512xi1> to vector<32x512xi1>
    %49 = vector.broadcast %cst_14 : bf16 to vector<32x512xbf16>
    %50 = arith.select %48, %41, %49 : vector<32x512xi1>, vector<32x512xbf16>
    %51 = vector.extract_strided_slice %7 {offsets = [0, 112], sizes = [32, 512], strides = [1, 1]} : vector<32x768xbf16> to vector<32x512xbf16>
    %c16_i32_15 = arith.constant 16 : i32
    %52 = vector.broadcast %c16_i32_15 : i32 to vector<1x512xi32>
    %53 = arith.cmpi sge, %24, %52 : vector<1x512xi32>
    %cst_16 = arith.constant 0.000000e+00 : bf16
    %54 = vector.shape_cast %53 : vector<1x512xi1> to vector<1x512xi1>
    %55 = vector.broadcast %54 : vector<1x512xi1> to vector<32x512xi1>
    %56 = vector.broadcast %cst_16 : bf16 to vector<32x512xbf16>
    %57 = arith.select %55, %51, %56 : vector<32x512xi1>, vector<32x512xbf16>
    %58 = vector.extract_strided_slice %7 {offsets = [0, 113], sizes = [32, 512], strides = [1, 1]} : vector<32x768xbf16> to vector<32x512xbf16>
    %c16_i32_17 = arith.constant 16 : i32
    %59 = vector.broadcast %c16_i32_17 : i32 to vector<1x512xi32>
    %60 = arith.cmpi sge, %24, %59 : vector<1x512xi32>
    %c15_i32 = arith.constant 15 : i32
    %61 = vector.broadcast %c15_i32 : i32 to vector<1x512xi32>
    %62 = arith.cmpi slt, %40, %61 : vector<1x512xi32>
    %63 = arith.andi %60, %62 : vector<1x512xi1>
    %cst_18 = arith.constant 0.000000e+00 : bf16
    %64 = vector.shape_cast %63 : vector<1x512xi1> to vector<1x512xi1>
    %65 = vector.broadcast %64 : vector<1x512xi1> to vector<32x512xi1>
    %66 = vector.broadcast %cst_18 : bf16 to vector<32x512xbf16>
    %67 = arith.select %65, %58, %66 : vector<32x512xi1>, vector<32x512xbf16>
    %68 = vector.extract_strided_slice %7 {offsets = [0, 127], sizes = [32, 512], strides = [1, 1]} : vector<32x768xbf16> to vector<32x512xbf16>
    %c1_i32_19 = arith.constant 1 : i32
    %69 = vector.broadcast %c1_i32_19 : i32 to vector<1x512xi32>
    %70 = arith.cmpi sge, %40, %69 : vector<1x512xi32>
    %cst_20 = arith.constant 0.000000e+00 : bf16
    %71 = vector.shape_cast %70 : vector<1x512xi1> to vector<1x512xi1>
    %72 = vector.broadcast %71 : vector<1x512xi1> to vector<32x512xi1>
    %73 = vector.broadcast %cst_20 : bf16 to vector<32x512xbf16>
    %74 = arith.select %72, %68, %73 : vector<32x512xi1>, vector<32x512xbf16>
    %75 = vector.extract_strided_slice %7 {offsets = [0, 128], sizes = [32, 512], strides = [1, 1]} : vector<32x768xbf16> to vector<32x512xbf16>
    %76 = vector.extract_strided_slice %7 {offsets = [0, 129], sizes = [32, 512], strides = [1, 1]} : vector<32x768xbf16> to vector<32x512xbf16>
    %c15_i32_21 = arith.constant 15 : i32
    %77 = vector.broadcast %c15_i32_21 : i32 to vector<1x512xi32>
    %78 = arith.cmpi slt, %40, %77 : vector<1x512xi32>
    %cst_22 = arith.constant 0.000000e+00 : bf16
    %79 = vector.shape_cast %78 : vector<1x512xi1> to vector<1x512xi1>
    %80 = vector.broadcast %79 : vector<1x512xi1> to vector<32x512xi1>
    %81 = vector.broadcast %cst_22 : bf16 to vector<32x512xbf16>
    %82 = arith.select %80, %76, %81 : vector<32x512xi1>, vector<32x512xbf16>
    %83 = vector.extract_strided_slice %7 {offsets = [0, 143], sizes = [32, 512], strides = [1, 1]} : vector<32x768xbf16> to vector<32x512xbf16>
    %c240_i32 = arith.constant 240 : i32
    %84 = vector.broadcast %c240_i32 : i32 to vector<1x512xi32>
    %85 = arith.cmpi slt, %24, %84 : vector<1x512xi32>
    %c1_i32_23 = arith.constant 1 : i32
    %86 = vector.broadcast %c1_i32_23 : i32 to vector<1x512xi32>
    %87 = arith.cmpi sge, %40, %86 : vector<1x512xi32>
    %88 = arith.andi %85, %87 : vector<1x512xi1>
    %cst_24 = arith.constant 0.000000e+00 : bf16
    %89 = vector.shape_cast %88 : vector<1x512xi1> to vector<1x512xi1>
    %90 = vector.broadcast %89 : vector<1x512xi1> to vector<32x512xi1>
    %91 = vector.broadcast %cst_24 : bf16 to vector<32x512xbf16>
    %92 = arith.select %90, %83, %91 : vector<32x512xi1>, vector<32x512xbf16>
    %93 = vector.extract_strided_slice %7 {offsets = [0, 144], sizes = [32, 512], strides = [1, 1]} : vector<32x768xbf16> to vector<32x512xbf16>
    %c240_i32_25 = arith.constant 240 : i32
    %94 = vector.broadcast %c240_i32_25 : i32 to vector<1x512xi32>
    %95 = arith.cmpi slt, %24, %94 : vector<1x512xi32>
    %cst_26 = arith.constant 0.000000e+00 : bf16
    %96 = vector.shape_cast %95 : vector<1x512xi1> to vector<1x512xi1>
    %97 = vector.broadcast %96 : vector<1x512xi1> to vector<32x512xi1>
    %98 = vector.broadcast %cst_26 : bf16 to vector<32x512xbf16>
    %99 = arith.select %97, %93, %98 : vector<32x512xi1>, vector<32x512xbf16>
    %100 = vector.extract_strided_slice %7 {offsets = [0, 145], sizes = [32, 512], strides = [1, 1]} : vector<32x768xbf16> to vector<32x512xbf16>
    %c240_i32_27 = arith.constant 240 : i32
    %101 = vector.broadcast %c240_i32_27 : i32 to vector<1x512xi32>
    %102 = arith.cmpi slt, %24, %101 : vector<1x512xi32>
    %c15_i32_28 = arith.constant 15 : i32
    %103 = vector.broadcast %c15_i32_28 : i32 to vector<1x512xi32>
    %104 = arith.cmpi slt, %40, %103 : vector<1x512xi32>
    %105 = arith.andi %102, %104 : vector<1x512xi1>
    %cst_29 = arith.constant 0.000000e+00 : bf16
    %106 = vector.shape_cast %105 : vector<1x512xi1> to vector<1x512xi1>
    %107 = vector.broadcast %106 : vector<1x512xi1> to vector<32x512xi1>
    %108 = vector.broadcast %cst_29 : bf16 to vector<32x512xbf16>
    %109 = arith.select %107, %100, %108 : vector<32x512xi1>, vector<32x512xbf16>
    %110 = tpu.concatenate %50, %57, %67, %74, %75, %82, %92, %99, %109 in 0 : vector<32x512xbf16>, vector<32x512xbf16>, vector<32x512xbf16>, vector<32x512xbf16>, vector<32x512xbf16>, vector<32x512xbf16>, vector<32x512xbf16>, vector<32x512xbf16>, vector<32x512xbf16> -> vector<288x512xbf16>
    %c0_30 = arith.constant 0 : index
    %c0_31 = arith.constant 0 : index
    %111 = vector.load %arg2[%c0_30, %c0_31] : memref<96x288xbf16, #tpu.memory_space<vmem>>, vector<96x288xbf16>
    %cst_32 = arith.constant dense<0.000000e+00> : vector<96x512xf32>
    %112 = tpu.matmul %111, %110, %cst_32 {dimension_numbers = #tpu.dot_dimension_numbers<[1], [0], [0], [1], [0, 0, 1, 1], [], []>} : vector<96x288xbf16>, vector<288x512xbf16>, vector<96x512xf32> -> vector<96x512xf32>
    %c0_33 = arith.constant 0 : index
    %c0_34 = arith.constant 0 : index
    %113 = vector.load %arg3[%c0_33, %c0_34] : memref<96x1xf32, #tpu.memory_space<vmem>>, vector<96x1xf32>
    %114 = vector.broadcast %113 : vector<96x1xf32> to vector<96x512xf32>
    %115 = arith.addf %112, %114 : vector<96x512xf32>
    %cst_35 = arith.constant 0.000000e+00 : f32
    %116 = vector.broadcast %cst_35 : f32 to vector<96x512xf32>
    %117 = arith.maximumf %115, %116 : vector<96x512xf32>
    %c0_36 = arith.constant 0 : index
    %c0_37 = arith.constant 0 : index
    %118 = vector.load %arg4[%c0_36, %c0_37] : memref<8x96xf32, #tpu.memory_space<vmem>>, vector<8x96xf32>
    %cst_38 = arith.constant dense<0.000000e+00> : vector<8x512xf32>
    %119 = tpu.matmul %118, %117, %cst_38 {dimension_numbers = #tpu.dot_dimension_numbers<[1], [0], [0], [1], [0, 0, 1, 1], [], []>} : vector<8x96xf32>, vector<96x512xf32>, vector<8x512xf32> -> vector<8x512xf32>
    %c0_39 = arith.constant 0 : index
    %c0_40 = arith.constant 0 : index
    %120 = vector.load %arg5[%c0_39, %c0_40] : memref<8x1xf32, #tpu.memory_space<vmem>>, vector<8x1xf32>
    %121 = vector.broadcast %120 : vector<8x1xf32> to vector<8x512xf32>
    %122 = arith.addf %119, %121 : vector<8x512xf32>
    %123 = vector.extract_strided_slice %122 {offsets = [0, 0], sizes = [8, 256], strides = [1, 1]} : vector<8x512xf32> to vector<8x256xf32>
    %c0_41 = arith.constant 0 : index
    %c0_42 = arith.constant 0 : index
    %c0_43 = arith.constant 0 : index
    %124 = vector.load %arg6[%c0_41, %c0_42, %c0_43] : memref<2x8x256xf32, #tpu.memory_space<vmem>>, vector<1x8x256xf32>
    %125 = vector.shape_cast %124 : vector<1x8x256xf32> to vector<8x256xf32>
    %126 = vector.shape_cast %123 : vector<8x256xf32> to vector<1x8x256xf32>
    tpu.vector_store %arg6[%c0_41, %c0_42, %c0_43], %126 {strides = array<i32>} : memref<2x8x256xf32, #tpu.memory_space<vmem>>, vector<1x8x256xf32>,
    %127 = vector.extract_strided_slice %122 {offsets = [0, 256], sizes = [8, 256], strides = [1, 1]} : vector<8x512xf32> to vector<8x256xf32>
    %c1_44 = arith.constant 1 : index
    %c0_45 = arith.constant 0 : index
    %c0_46 = arith.constant 0 : index
    %128 = vector.load %arg6[%c1_44, %c0_45, %c0_46] : memref<2x8x256xf32, #tpu.memory_space<vmem>>, vector<1x8x256xf32>
    %129 = vector.shape_cast %128 : vector<1x8x256xf32> to vector<8x256xf32>
    %130 = vector.shape_cast %127 : vector<8x256xf32> to vector<1x8x256xf32>
    tpu.vector_store %arg6[%c1_44, %c0_45, %c0_46], %130 {strides = array<i32>} : memref<2x8x256xf32, #tpu.memory_space<vmem>>, vector<1x8x256xf32>,
    return
  }
  func.func @transform_0(%arg0: i32) -> (i32, i32, i32) {
    %c0_i32 = arith.constant 0 : i32
    %c0_i32_0 = arith.constant 0 : i32
    %c0_i32_1 = arith.constant 0 : i32
    return %arg0, %c0_i32, %c0_i32_0 : i32, i32, i32
  }
  func.func @transform_1(%arg0: i32) -> (i32, i32) {
    %c0_i32 = arith.constant 0 : i32
    %c0_i32_0 = arith.constant 0 : i32
    %c0_i32_1 = arith.constant 0 : i32
    return %c0_i32, %c0_i32_0 : i32, i32
  }
  func.func @transform_2(%arg0: i32) -> (i32, i32) {
    %c0_i32 = arith.constant 0 : i32
    %c0_i32_0 = arith.constant 0 : i32
    %c0_i32_1 = arith.constant 0 : i32
    return %c0_i32, %c0_i32_0 : i32, i32
  }
  func.func @transform_3(%arg0: i32) -> (i32, i32) {
    %c0_i32 = arith.constant 0 : i32
    %c0_i32_0 = arith.constant 0 : i32
    %c0_i32_1 = arith.constant 0 : i32
    return %c0_i32, %c0_i32_0 : i32, i32
  }
  func.func @transform_4(%arg0: i32) -> (i32, i32) {
    %c0_i32 = arith.constant 0 : i32
    %c0_i32_0 = arith.constant 0 : i32
    %c0_i32_1 = arith.constant 0 : i32
    return %c0_i32, %c0_i32_0 : i32, i32
  }
  func.func @transform_5(%arg0: i32) -> (i32, i32, i32) {
    %c0_i32 = arith.constant 0 : i32
    %c0_i32_0 = arith.constant 0 : i32
    %c0_i32_1 = arith.constant 0 : i32
    return %arg0, %c0_i32, %c0_i32_0 : i32, i32, i32
  }
}

</mosaic_0001>

<llo_original>
// kernel: nocs_head_forward.1
$region0: #{nocs_head_forward.1}
  #allocation0 [shape = 'u32[]', space=smem, size = 0x4, offset = 0x4, fixed_abs, tag = 'smem constant byte address 0x4 - core index']
  #allocation1 [shape = 'u32[144,128]{1,0:T(1,128)}', space=vmem, size = 0x12000, scoped, tag = 'internal scratch']
  %s0 = inlined_call_operand.vmem [shape: f32[2,32,256], index: 0, kind: input, shape index: {}]
  %s1 = inlined_call_operand.vmem [shape: bf16[96,288], index: 1, kind: input, shape index: {}]
  %s2 = inlined_call_operand.vmem [shape: f32[96,1], index: 2, kind: input, shape index: {}]
  %s3 = inlined_call_operand.vmem [shape: f32[8,96], index: 3, kind: input, shape index: {}]
  %s4 = inlined_call_operand.vmem [shape: f32[8,1], index: 4, kind: input, shape index: {}]
  %s5 = inlined_call_operand.vmem [shape: f32[2,8,256], index: 5, kind: output, shape index: {}]
  %s6 = sld [smem:[#allocation0]]
  $region30: #{nocs_head_forward.1} parent=0
    _
  %s8 = ssub.s32 1, %s6
  %s9 = scalar_select 0, %s8, %s6
  // Predicated region
  $region2: #{nocs_head_forward.1} parent=0 // pred_check
    _
  $region3: #{nocs_head_forward.1} parent=0 // pred_check_branch
    %11 = sbr.rel (0) target = $region5
  $region4: #{nocs_head_forward.1} parent=0 // pred_region
    _
  $region5: #{nocs_head_forward.1} parent=0 // pred_fallthru
    _
  // Predicated region
  $region6: #{nocs_head_forward.1} parent=0 // pred_check
    _
  $region7: #{nocs_head_forward.1} parent=0 // pred_check_branch
    %13 = sbr.rel (0) target = $region9
  $region8: #{nocs_head_forward.1} parent=0 // pred_region
    _
  $region9: #{nocs_head_forward.1} parent=0 // pred_fallthru
    _
  // Predicated region
  $region10: #{nocs_head_forward.1} parent=0 // pred_check
    _
  $region11: #{nocs_head_forward.1} parent=0 // pred_check_branch
    %15 = sbr.rel (0) target = $region13
  $region12: #{nocs_head_forward.1} parent=0 // pred_region
    _
  $region13: #{nocs_head_forward.1} parent=0 // pred_fallthru
    _
  // Predicated region
  $region14: #{nocs_head_forward.1} parent=0 // pred_check
    _
  $region15: #{nocs_head_forward.1} parent=0 // pred_check_branch
    %17 = sbr.rel (0) target = $region17
  $region16: #{nocs_head_forward.1} parent=0 // pred_region
    _
  $region17: #{nocs_head_forward.1} parent=0 // pred_fallthru
    _
  // Predicated region
  $region18: #{nocs_head_forward.1} parent=0 // pred_check
    _
  $region19: #{nocs_head_forward.1} parent=0 // pred_check_branch
    %19 = sbr.rel (0) target = $region21
  $region20: #{nocs_head_forward.1} parent=0 // pred_region
    _
  $region21: #{nocs_head_forward.1} parent=0 // pred_fallthru
    _
  %v23 = vld [vmem:[%s0] sm:$0xff]
  %v24 = vld [vmem:[%s0 + $0x8] sm:$0xff]
  %v25 = vld [vmem:[%s0 + $0x10] sm:$0xff]
  %v26 = vld [vmem:[%s0 + $0x18] sm:$0xff]
  %v27 = vld [vmem:[%s0 + $0x20] sm:$0xff]
  %v28 = vld [vmem:[%s0 + $0x28] sm:$0xff]
  %v29 = vld [vmem:[%s0 + $0x30] sm:$0xff]
  %v30 = vld [vmem:[%s0 + $0x38] sm:$0xff]
  %s31 = scalar_lea.vmem %s0, 64
  %v32 = vld [vmem:[%s31] sm:$0xff]
  %v33 = vld [vmem:[%s31 + $0x8] sm:$0xff]
  %v34 = vld [vmem:[%s31 + $0x10] sm:$0xff]
  %v35 = vld [vmem:[%s31 + $0x18] sm:$0xff]
  %v36 = vld [vmem:[%s31 + $0x20] sm:$0xff]
  %v37 = vld [vmem:[%s31 + $0x28] sm:$0xff]
  %v38 = vld [vmem:[%s31 + $0x30] sm:$0xff]
  %v39 = vld [vmem:[%s31 + $0x38] sm:$0xff]
  %v40 = vpack.c.bf16 %v25, %v23
  %v41 = vpack.c.bf16 %v26, %v24
  %v42 = vpack.c.bf16 %v34, %v32
  %v43 = vpack.c.bf16 %v35, %v33
  %v44 = vpack.c.bf16 %v29, %v27
  %v45 = vpack.c.bf16 %v30, %v28
  %v46 = vpack.c.bf16 %v38, %v36
  %v47 = vpack.c.bf16 %v39, %v37
  %v48 = vlaneseq
  %v49 = vand.u32 %v48, 127
  %v50 = vadd.s32 %v49, 128
  %v51 = vadd.s32 %v49, 256
  %v52 = vadd.s32 %v49, 384
  %vm53 = vcmp.lt.s32.totalorder %v49, 0
  %v54 = vsub.s32 0, %v49
  %v55 = vsel %vm53, %v54, %v49
  %v56 = vshrl.u32 %v55, 8
  %v57 = vand.u32 %v55, 255
  %v58 = vsub.s32 0, %v57
  %v59 = vsel %vm53, %v58, %v57
  %vm60 = vcmp.lt.s32.totalorder %v50, 0
  %v61 = vsub.s32 0, %v50
  %v62 = vsel %vm60, %v61, %v50
  %v63 = vshrl.u32 %v62, 8
  %v64 = vand.u32 %v62, 255
  %v65 = vsub.s32 0, %v64
  %v66 = vsel %vm60, %v65, %v64
  %vm67 = vcmp.lt.s32.totalorder %v51, 0
  %v68 = vsub.s32 0, %v51
  %v69 = vsel %vm67, %v68, %v51
  %v70 = vshrl.u32 %v69, 8
  %v71 = vand.u32 %v69, 255
  %v72 = vsub.s32 0, %v71
  %v73 = vsel %vm67, %v72, %v71
  %vm74 = vcmp.lt.s32.totalorder %v52, 0
  %v75 = vsub.s32 0, %v52
  %v76 = vsel %vm74, %v75, %v52
  %v77 = vshrl.u32 %v76, 8
  %v78 = vand.u32 %v76, 255
  %v79 = vsub.s32 0, %v78
  %v80 = vsel %vm74, %v79, %v78
  %vm81 = vcmp.ne.s32.totalorder %v59, 0
  %vm82 = vcmp.ne.s32.totalorder %v66, 0
  %vm83 = vcmp.ne.s32.totalorder %v73, 0
  %vm84 = vcmp.ne.s32.totalorder %v80, 0
  %vm85 = vcmp.lt.s32.totalorder %v59, 0
  %vm86 = vcmp.lt.s32.totalorder %v66, 0
  %vm87 = vcmp.lt.s32.totalorder %v73, 0
  %vm88 = vcmp.lt.s32.totalorder %v80, 0
  %vm89 = vmand %vm85, %vm81
  %vm90 = vmand %vm86, %vm82
  %vm91 = vmand %vm87, %vm83
  %vm92 = vmand %vm88, %vm84
  %v93 = vadd.s32 %v59, 256
  %v94 = vadd.s32 %v66, 256
  %v95 = vadd.s32 %v73, 256
  %v96 = vadd.s32 %v80, 256
  %v97 = vsel %vm89, %v93, %v59
  %v98 = vsel %vm90, %v94, %v66
  %v99 = vsel %vm91, %v95, %v73
  %v100 = vsel %vm92, %v96, %v80
  %vm101 = vcmp.lt.s32.totalorder %v97, 0
  %v102 = vsub.s32 0, %v97
  %v103 = vsel %vm101, %v102, %v97
  %v104 = vshrl.u32 %v103, 4
  %v105 = vand.u32 %v103, 15
  %v106 = vsub.s32 0, %v105
  %v107 = vsel %vm101, %v106, %v105
  %vm108 = vcmp.lt.s32.totalorder %v98, 0
  %v109 = vsub.s32 0, %v98
  %v110 = vsel %vm108, %v109, %v98
  %v111 = vshrl.u32 %v110, 4
  %v112 = vand.u32 %v110, 15
  %v113 = vsub.s32 0, %v112
  %v114 = vsel %vm108, %v113, %v112
  %vm115 = vcmp.lt.s32.totalorder %v99, 0
  %v116 = vsub.s32 0, %v99
  %v117 = vsel %vm115, %v116, %v99
  %v118 = vshrl.u32 %v117, 4
  %v119 = vand.u32 %v117, 15
  %v120 = vsub.s32 0, %v119
  %v121 = vsel %vm115, %v120, %v119
  %vm122 = vcmp.lt.s32.totalorder %v100, 0
  %v123 = vsub.s32 0, %v100
  %v124 = vsel %vm122, %v123, %v100
  %v125 = vshrl.u32 %v124, 4
  %v126 = vand.u32 %v124, 15
  %v127 = vsub.s32 0, %v126
  %v128 = vsel %vm122, %v127, %v126
  %vm129 = vcmp.ne.s32.totalorder %v107, 0
  %vm130 = vcmp.ne.s32.totalorder %v114, 0
  %vm131 = vcmp.ne.s32.totalorder %v121, 0
  %vm132 = vcmp.ne.s32.totalorder %v128, 0
  %vm133 = vcmp.lt.s32.totalorder %v107, 0
  %vm134 = vcmp.lt.s32.totalorder %v114, 0
  %vm135 = vcmp.lt.s32.totalorder %v121, 0
  %vm136 = vcmp.lt.s32.totalorder %v128, 0
  %vm137 = vmand %vm133, %vm129
  %vm138 = vmand %vm134, %vm130
  %vm139 = vmand %vm135, %vm131
  %vm140 = vmand %vm136, %vm132
  %v141 = vadd.s32 %v107, 16
  %v142 = vadd.s32 %v114, 16
  %v143 = vadd.s32 %v121, 16
  %v144 = vadd.s32 %v128, 16
  %v145 = vsel %vm137, %v141, %v107
  %v146 = vsel %vm138, %v142, %v114
  %v147 = vsel %vm139, %v143, %v121
  %v148 = vsel %vm140, %v144, %v128
  %vm149 = vcmp.ge.s32.totalorder %v97, 16
  %vm150 = vcmp.ge.s32.totalorder %v98, 16
  %vm151 = vcmp.ge.s32.totalorder %v99, 16
  %vm152 = vcmp.ge.s32.totalorder %v100, 16
  %vm153 = vcmp.ge.s32.totalorder %v145, 1
  %vm154 = vcmp.ge.s32.totalorder %v146, 1
  %vm155 = vcmp.ge.s32.totalorder %v147, 1
  %vm156 = vcmp.ge.s32.totalorder %v148, 1
  %vm157 = vmand %vm149, %vm153
  %vm158 = vmand %vm150, %vm154
  %vm159 = vmand %vm151, %vm155
  %vm160 = vmand %vm152, %vm156
  %v161 = vsel %vm157, 1, 0
  %v162 = vsel %vm158, 1, 0
  %v163 = vsel %vm159, 1, 0
  %v164 = vsel %vm160, 1, 0
  %vm165 = vcmp.eq.s32.totalorder %v161, 1
  %vm166 = vcmp.eq.s32.totalorder %v162, 1
  %vm167 = vcmp.eq.s32.totalorder %v163, 1
  %vm168 = vcmp.eq.s32.totalorder %v164, 1
  %vm169 = vmpackc.low %vm166, %vm165
  %vm170 = vmpackc.low %vm168, %vm167
  %v171 = vsel %vm169, 65537, 0
  %v172 = vsel %vm170, 65537, 0
  %v173 = vlaneseq
  %v174 = vshrl.u32 %v173, 7
  %v175 = vsub.s32 0, %v174
  %v176 = vrot.slane %v171, %v175
  %v177 = vlaneseq
  %v178 = vshrl.u32 %v177, 7
  %v179 = vsub.s32 4, %v178
  %v180 = vrot.slane %v171, %v179
  %v181 = vlaneseq
  %v182 = vshrl.u32 %v181, 7
  %v183 = vsub.s32 0, %v182
  %v184 = vrot.slane %v172, %v183
  %v185 = vlaneseq
  %v186 = vshrl.u32 %v185, 7
  %v187 = vsub.s32 4, %v186
  %v188 = vrot.slane %v172, %v187
  %189 = vrot.lane.b32.xlu0 %v176, 111
  %v190 = vpop.permute.xlu0 %189
  %191 = vrot.lane.b32.xlu0 %v180, 111
  %v192 = vpop.permute.xlu0 %191
  %193 = vrot.lane.b32.xlu0 %v184, 111
  %v194 = vpop.permute.xlu0 %193
  %195 = vrot.lane.b32.xlu0 %v188, 111
  %v196 = vpop.permute.xlu0 %195
  %vm197 = vcmask 908288
  %v198 = vsel %vm197, %v190, %v192
  %v199 = vsel %vm197, %v192, %v194
  %v200 = vsel %vm197, %v194, %v196
  %vm201 = vcmp.ne.s16.totalorder %v198, 0
  %vm202 = vcmp.ne.s16.totalorder %v199, 0
  %vm203 = vcmp.ne.s16.totalorder %v200, 0
  %vm204 = vcmp.ne.s16.totalorder %v196, 0
  %v205 = vsel %vm201, %v40, 0
  %v206 = vsel %vm202, %v41, 0
  %v207 = vsel %vm203, %v42, 0
  %v208 = vsel %vm204, %v43, 0
  %v209 = vsel %vm201, %v44, 0
  %v210 = vsel %vm202, %v45, 0
  %v211 = vsel %vm203, %v46, 0
  %v212 = vsel %vm204, %v47, 0
  %v213 = vsel %vm149, 1, 0
  %v214 = vsel %vm150, 1, 0
  %v215 = vsel %vm151, 1, 0
  %v216 = vsel %vm152, 1, 0
  %vm217 = vcmp.eq.s32.totalorder %v213, 1
  %vm218 = vcmp.eq.s32.totalorder %v214, 1
  %vm219 = vcmp.eq.s32.totalorder %v215, 1
  %vm220 = vcmp.eq.s32.totalorder %v216, 1
  %vm221 = vmpackc.low %vm218, %vm217
  %vm222 = vmpackc.low %vm220, %vm219
  %v223 = vsel %vm221, 65537, 0
  %v224 = vsel %vm222, 65537, 0
  %v225 = vlaneseq
  %v226 = vshrl.u32 %v225, 7
  %v227 = vsub.s32 0, %v226
  %v228 = vrot.slane %v223, %v227
  %v229 = vlaneseq
  %v230 = vshrl.u32 %v229, 7
  %v231 = vsub.s32 4, %v230
  %v232 = vrot.slane %v223, %v231
  %v233 = vlaneseq
  %v234 = vshrl.u32 %v233, 7
  %v235 = vsub.s32 0, %v234
  %v236 = vrot.slane %v224, %v235
  %v237 = vlaneseq
  %v238 = vshrl.u32 %v237, 7
  %v239 = vsub.s32 4, %v238
  %v240 = vrot.slane %v224, %v239
  %241 = vrot.lane.b32.xlu0 %v228, 112
  %v242 = vpop.permute.xlu0 %241
  %243 = vrot.lane.b32.xlu0 %v232, 112
  %v244 = vpop.permute.xlu0 %243
  %245 = vrot.lane.b32.xlu0 %v236, 112
  %v246 = vpop.permute.xlu0 %245
  %247 = vrot.lane.b32.xlu0 %v240, 112
  %v248 = vpop.permute.xlu0 %247
  %vm249 = vcmask 916480
  %v250 = vsel %vm249, %v242, %v244
  %v251 = vsel %vm249, %v244, %v246
  %v252 = vsel %vm249, %v246, %v248
  %vm253 = vcmp.ne.s16.totalorder %v250, 0
  %vm254 = vcmp.ne.s16.totalorder %v251, 0
  %vm255 = vcmp.ne.s16.totalorder %v252, 0
  %vm256 = vcmp.ne.s16.totalorder %v248, 0
  %v257 = vsel %vm253, %v40, 0
  %v258 = vsel %vm254, %v41, 0
  %v259 = vsel %vm255, %v42, 0
  %v260 = vsel %vm256, %v43, 0
  %v261 = vsel %vm253, %v44, 0
  %v262 = vsel %vm254, %v45, 0
  %v263 = vsel %vm255, %v46, 0
  %v264 = vsel %vm256, %v47, 0
  %vm265 = vcmp.lt.s32.totalorder %v145, 15
  %vm266 = vcmp.lt.s32.totalorder %v146, 15
  %vm267 = vcmp.lt.s32.totalorder %v147, 15
  %vm268 = vcmp.lt.s32.totalorder %v148, 15
  %vm269 = vmand %vm149, %vm265
  %vm270 = vmand %vm150, %vm266
  %vm271 = vmand %vm151, %vm267
  %vm272 = vmand %vm152, %vm268
  %v273 = vsel %vm269, 1, 0
  %v274 = vsel %vm270, 1, 0
  %v275 = vsel %vm271, 1, 0
  %v276 = vsel %vm272, 1, 0
  %vm277 = vcmp.eq.s32.totalorder %v273, 1
  %vm278 = vcmp.eq.s32.totalorder %v274, 1
  %vm279 = vcmp.eq.s32.totalorder %v275, 1
  %vm280 = vcmp.eq.s32.totalorder %v276, 1
  %vm281 = vmpackc.low %vm278, %vm277
  %vm282 = vmpackc.low %vm280, %vm279
  %v283 = vsel %vm281, 65537, 0
  %v284 = vsel %vm282, 65537, 0
  %v285 = vlaneseq
  %v286 = vshrl.u32 %v285, 7
  %v287 = vsub.s32 0, %v286
  %v288 = vrot.slane %v283, %v287
  %v289 = vlaneseq
  %v290 = vshrl.u32 %v289, 7
  %v291 = vsub.s32 4, %v290
  %v292 = vrot.slane %v283, %v291
  %v293 = vlaneseq
  %v294 = vshrl.u32 %v293, 7
  %v295 = vsub.s32 0, %v294
  %v296 = vrot.slane %v284, %v295
  %v297 = vlaneseq
  %v298 = vshrl.u32 %v297, 7
  %v299 = vsub.s32 4, %v298
  %v300 = vrot.slane %v284, %v299
  %301 = vrot.lane.b32.xlu0 %v288, 113
  %v302 = vpop.permute.xlu0 %301
  %303 = vrot.lane.b32.xlu0 %v292, 113
  %v304 = vpop.permute.xlu0 %303
  %305 = vrot.lane.b32.xlu0 %v296, 113
  %v306 = vpop.permute.xlu0 %305
  %307 = vrot.lane.b32.xlu0 %v300, 113
  %v308 = vpop.permute.xlu0 %307
  %vm309 = vcmask 924672
  %v310 = vsel %vm309, %v302, %v304
  %v311 = vsel %vm309, %v304, %v306
  %v312 = vsel %vm309, %v306, %v308
  %vm313 = vcmp.ne.s16.totalorder %v310, 0
  %vm314 = vcmp.ne.s16.totalorder %v311, 0
  %vm315 = vcmp.ne.s16.totalorder %v312, 0
  %vm316 = vcmp.ne.s16.totalorder %v308, 0
  %v317 = vsel %vm313, %v40, 0
  %v318 = vsel %vm314, %v41, 0
  %v319 = vsel %vm315, %v42, 0
  %v320 = vsel %vm316, %v43, 0
  %v321 = vsel %vm313, %v44, 0
  %v322 = vsel %vm314, %v45, 0
  %v323 = vsel %vm315, %v46, 0
  %v324 = vsel %vm316, %v47, 0
  %v325 = vsel %vm153, 1, 0
  %v326 = vsel %vm154, 1, 0
  %v327 = vsel %vm155, 1, 0
  %v328 = vsel %vm156, 1, 0
  %vm329 = vcmp.eq.s32.totalorder %v325, 1
  %vm330 = vcmp.eq.s32.totalorder %v326, 1
  %vm331 = vcmp.eq.s32.totalorder %v327, 1
  %vm332 = vcmp.eq.s32.totalorder %v328, 1
  %vm333 = vmpackc.low %vm330, %vm329
  %vm334 = vmpackc.low %vm332, %vm331
  %v335 = vsel %vm333, 65537, 0
  %v336 = vsel %vm334, 65537, 0
  %v337 = vlaneseq
  %v338 = vshrl.u32 %v337, 7
  %v339 = vsub.s32 0, %v338
  %v340 = vrot.slane %v335, %v339
  %v341 = vlaneseq
  %v342 = vshrl.u32 %v341, 7
  %v343 = vsub.s32 4, %v342
  %v344 = vrot.slane %v335, %v343
  %v345 = vlaneseq
  %v346 = vshrl.u32 %v345, 7
  %v347 = vsub.s32 0, %v346
  %v348 = vrot.slane %v336, %v347
  %v349 = vlaneseq
  %v350 = vshrl.u32 %v349, 7
  %v351 = vsub.s32 4, %v350
  %v352 = vrot.slane %v336, %v351
  %353 = vrot.lane.b32.xlu0 %v340, 127
  %v354 = vpop.permute.xlu0 %353
  %355 = vrot.lane.b32.xlu0 %v344, 127
  %v356 = vpop.permute.xlu0 %355
  %357 = vrot.lane.b32.xlu0 %v348, 127
  %v358 = vpop.permute.xlu0 %357
  %359 = vrot.lane.b32.xlu0 %v352, 127
  %v360 = vpop.permute.xlu0 %359
  %vm361 = vcmask 1039360
  %v362 = vsel %vm361, %v354, %v356
  %v363 = vsel %vm361, %v356, %v358
  %v364 = vsel %vm361, %v358, %v360
  %vm365 = vcmp.ne.s16.totalorder %v362, 0
  %vm366 = vcmp.ne.s16.totalorder %v363, 0
  %vm367 = vcmp.ne.s16.totalorder %v364, 0
  %vm368 = vcmp.ne.s16.totalorder %v360, 0
  %v369 = vsel %vm365, %v40, 0
  %v370 = vsel %vm366, %v41, 0
  %v371 = vsel %vm367, %v42, 0
  %v372 = vsel %vm368, %v43, 0
  %v373 = vsel %vm365, %v44, 0
  %v374 = vsel %vm366, %v45, 0
  %v375 = vsel %vm367, %v46, 0
  %v376 = vsel %vm368, %v47, 0
  %v377 = vsel %vm265, 1, 0
  %v378 = vsel %vm266, 1, 0
  %v379 = vsel %vm267, 1, 0
  %v380 = vsel %vm268, 1, 0
  %vm381 = vcmp.eq.s32.totalorder %v377, 1
  %vm382 = vcmp.eq.s32.totalorder %v378, 1
  %vm383 = vcmp.eq.s32.totalorder %v379, 1
  %vm384 = vcmp.eq.s32.totalorder %v380, 1
  %vm385 = vmpackc.low %vm382, %vm381
  %vm386 = vmpackc.low %vm384, %vm383
  %v387 = vsel %vm385, 65537, 0
  %v388 = vsel %vm386, 65537, 0
  %v389 = vlaneseq
  %v390 = vshrl.u32 %v389, 7
  %v391 = vsub.s32 0, %v390
  %v392 = vrot.slane %v387, %v391
  %v393 = vlaneseq
  %v394 = vshrl.u32 %v393, 7
  %v395 = vsub.s32 4, %v394
  %v396 = vrot.slane %v387, %v395
  %v397 = vlaneseq
  %v398 = vshrl.u32 %v397, 7
  %v399 = vsub.s32 0, %v398
  %v400 = vrot.slane %v388, %v399
  %v401 = vlaneseq
  %v402 = vshrl.u32 %v401, 7
  %v403 = vsub.s32 4, %v402
  %v404 = vrot.slane %v388, %v403
  %405 = vrot.lane.b32.xlu0 %v392, 1
  %v406 = vpop.permute.xlu0 %405
  %407 = vrot.lane.b32.xlu0 %v396, 1
  %v408 = vpop.permute.xlu0 %407
  %409 = vrot.lane.b32.xlu0 %v400, 1
  %v410 = vpop.permute.xlu0 %409
  %411 = vrot.lane.b32.xlu0 %v404, 1
  %v412 = vpop.permute.xlu0 %411
  %vm413 = vcmask 7168
  %v414 = vsel %vm413, %v406, %v408
  %v415 = vsel %vm413, %v408, %v410
  %v416 = vsel %vm413, %v410, %v412
  %vm417 = vcmp.ne.s16.totalorder %v406, 0
  %vm418 = vcmp.ne.s16.totalorder %v414, 0
  %vm419 = vcmp.ne.s16.totalorder %v415, 0
  %vm420 = vcmp.ne.s16.totalorder %v416, 0
  %v421 = vsel %vm417, %v40, 0
  %v422 = vsel %vm418, %v41, 0
  %v423 = vsel %vm419, %v42, 0
  %v424 = vsel %vm420, %v43, 0
  %v425 = vsel %vm417, %v44, 0
  %v426 = vsel %vm418, %v45, 0
  %v427 = vsel %vm419, %v46, 0
  %v428 = vsel %vm420, %v47, 0
  %vm429 = vcmp.lt.s32.totalorder %v97, 240
  %vm430 = vcmp.lt.s32.totalorder %v98, 240
  %vm431 = vcmp.lt.s32.totalorder %v99, 240
  %vm432 = vcmp.lt.s32.totalorder %v100, 240
  %vm433 = vmand %vm429, %vm153
  %vm434 = vmand %vm430, %vm154
  %vm435 = vmand %vm431, %vm155
  %vm436 = vmand %vm432, %vm156
  %v437 = vsel %vm433, 1, 0
  %v438 = vsel %vm434, 1, 0
  %v439 = vsel %vm435, 1, 0
  %v440 = vsel %vm436, 1, 0
  %vm441 = vcmp.eq.s32.totalorder %v437, 1
  %vm442 = vcmp.eq.s32.totalorder %v438, 1
  %vm443 = vcmp.eq.s32.totalorder %v439, 1
  %vm444 = vcmp.eq.s32.totalorder %v440, 1
  %vm445 = vmpackc.low %vm442, %vm441
  %vm446 = vmpackc.low %vm444, %vm443
  %v447 = vsel %vm445, 65537, 0
  %v448 = vsel %vm446, 65537, 0
  %v449 = vlaneseq
  %v450 = vshrl.u32 %v449, 7
  %v451 = vsub.s32 0, %v450
  %v452 = vrot.slane %v447, %v451
  %v453 = vlaneseq
  %v454 = vshrl.u32 %v453, 7
  %v455 = vsub.s32 4, %v454
  %v456 = vrot.slane %v447, %v455
  %v457 = vlaneseq
  %v458 = vshrl.u32 %v457, 7
  %v459 = vsub.s32 0, %v458
  %v460 = vrot.slane %v448, %v459
  %v461 = vlaneseq
  %v462 = vshrl.u32 %v461, 7
  %v463 = vsub.s32 4, %v462
  %v464 = vrot.slane %v448, %v463
  %465 = vrot.lane.b32.xlu0 %v452, 15
  %v466 = vpop.permute.xlu0 %465
  %467 = vrot.lane.b32.xlu0 %v456, 15
  %v468 = vpop.permute.xlu0 %467
  %469 = vrot.lane.b32.xlu0 %v460, 15
  %v470 = vpop.permute.xlu0 %469
  %471 = vrot.lane.b32.xlu0 %v464, 15
  %v472 = vpop.permute.xlu0 %471
  %vm473 = vcmask 121856
  %v474 = vsel %vm473, %v466, %v468
  %v475 = vsel %vm473, %v468, %v470
  %v476 = vsel %vm473, %v470, %v472
  %vm477 = vcmp.ne.s16.totalorder %v466, 0
  %vm478 = vcmp.ne.s16.totalorder %v474, 0
  %vm479 = vcmp.ne.s16.totalorder %v475, 0
  %vm480 = vcmp.ne.s16.totalorder %v476, 0
  %v481 = vsel %vm477, %v40, 0
  %v482 = vsel %vm478, %v41, 0
  %v483 = vsel %vm479, %v42, 0
  %v484 = vsel %vm480, %v43, 0
  %v485 = vsel %vm477, %v44, 0
  %v486 = vsel %vm478, %v45, 0
  %v487 = vsel %vm479, %v46, 0
  %v488 = vsel %vm480, %v47, 0
  %v489 = vsel %vm429, 1, 0
  %v490 = vsel %vm430, 1, 0
  %v491 = vsel %vm431, 1, 0
  %v492 = vsel %vm432, 1, 0
  %vm493 = vcmp.eq.s32.totalorder %v489, 1
  %vm494 = vcmp.eq.s32.totalorder %v490, 1
  %vm495 = vcmp.eq.s32.totalorder %v491, 1
  %vm496 = vcmp.eq.s32.totalorder %v492, 1
  %vm497 = vmpackc.low %vm494, %vm493
  %vm498 = vmpackc.low %vm496, %vm495
  %v499 = vsel %vm497, 65537, 0
  %v500 = vsel %vm498, 65537, 0
  %v501 = vlaneseq
  %v502 = vshrl.u32 %v501, 7
  %v503 = vsub.s32 0, %v502
  %v504 = vrot.slane %v499, %v503
  %v505 = vlaneseq
  %v506 = vshrl.u32 %v505, 7
  %v507 = vsub.s32 4, %v506
  %v508 = vrot.slane %v499, %v507
  %v509 = vlaneseq
  %v510 = vshrl.u32 %v509, 7
  %v511 = vsub.s32 0, %v510
  %v512 = vrot.slane %v500, %v511
  %v513 = vlaneseq
  %v514 = vshrl.u32 %v513, 7
  %v515 = vsub.s32 4, %v514
  %v516 = vrot.slane %v500, %v515
  %517 = vrot.lane.b32.xlu0 %v504, 16
  %v518 = vpop.permute.xlu0 %517
  %519 = vrot.lane.b32.xlu0 %v508, 16
  %v520 = vpop.permute.xlu0 %519
  %521 = vrot.lane.b32.xlu0 %v512, 16
  %v522 = vpop.permute.xlu0 %521
  %523 = vrot.lane.b32.xlu0 %v516, 16
  %v524 = vpop.permute.xlu0 %523
  %vm525 = vcmask 130048
  %v526 = vsel %vm525, %v518, %v520
  %v527 = vsel %vm525, %v520, %v522
  %v528 = vsel %vm525, %v522, %v524
  %vm529 = vcmp.ne.s16.totalorder %v518, 0
  %vm530 = vcmp.ne.s16.totalorder %v526, 0
  %vm531 = vcmp.ne.s16.totalorder %v527, 0
  %vm532 = vcmp.ne.s16.totalorder %v528, 0
  %v533 = vsel %vm529, %v40, 0
  %v534 = vsel %vm530, %v41, 0
  %v535 = vsel %vm531, %v42, 0
  %v536 = vsel %vm532, %v43, 0
  %v537 = vsel %vm529, %v44, 0
  %v538 = vsel %vm530, %v45, 0
  %v539 = vsel %vm531, %v46, 0
  %v540 = vsel %vm532, %v47, 0
  %vm541 = vmand %vm429, %vm265
  %vm542 = vmand %vm430, %vm266
  %vm543 = vmand %vm431, %vm267
  %vm544 = vmand %vm432, %vm268
  %v545 = vsel %vm541, 1, 0
  %v546 = vsel %vm542, 1, 0
  %v547 = vsel %vm543, 1, 0
  %v548 = vsel %vm544, 1, 0
  %vm549 = vcmp.eq.s32.totalorder %v545, 1
  %vm550 = vcmp.eq.s32.totalorder %v546, 1
  %vm551 = vcmp.eq.s32.totalorder %v547, 1
  %vm552 = vcmp.eq.s32.totalorder %v548, 1
  %vm553 = vmpackc.low %vm550, %vm549
  %vm554 = vmpackc.low %vm552, %vm551
  %v555 = vsel %vm553, 65537, 0
  %v556 = vsel %vm554, 65537, 0
  %v557 = vlaneseq
  %v558 = vshrl.u32 %v557, 7
  %v559 = vsub.s32 0, %v558
  %v560 = vrot.slane %v555, %v559
  %v561 = vlaneseq
  %v562 = vshrl.u32 %v561, 7
  %v563 = vsub.s32 4, %v562
  %v564 = vrot.slane %v555, %v563
  %v565 = vlaneseq
  %v566 = vshrl.u32 %v565, 7
  %v567 = vsub.s32 0, %v566
  %v568 = vrot.slane %v556, %v567
  %v569 = vlaneseq
  %v570 = vshrl.u32 %v569, 7
  %v571 = vsub.s32 4, %v570
  %v572 = vrot.slane %v556, %v571
  %573 = vrot.lane.b32.xlu0 %v560, 17
  %v574 = vpop.permute.xlu0 %573
  %575 = vrot.lane.b32.xlu0 %v564, 17
  %v576 = vpop.permute.xlu0 %575
  %577 = vrot.lane.b32.xlu0 %v568, 17
  %v578 = vpop.permute.xlu0 %577
  %579 = vrot.lane.b32.xlu0 %v572, 17
  %v580 = vpop.permute.xlu0 %579
  %vm581 = vcmask 138240
  %v582 = vsel %vm581, %v574, %v576
  %v583 = vsel %vm581, %v576, %v578
  %v584 = vsel %vm581, %v578, %v580
  %vm585 = vcmp.ne.s16.totalorder %v574, 0
  %vm586 = vcmp.ne.s16.totalorder %v582, 0
  %vm587 = vcmp.ne.s16.totalorder %v583, 0
  %vm588 = vcmp.ne.s16.totalorder %v584, 0
  %v589 = vsel %vm585, %v40, 0
  %v590 = vsel %vm586, %v41, 0
  %v591 = vsel %vm587, %v42, 0
  %v592 = vsel %vm588, %v43, 0
  %v593 = vsel %vm585, %v44, 0
  %v594 = vsel %vm586, %v45, 0
  %v595 = vsel %vm587, %v46, 0
  %v596 = vsel %vm588, %v47, 0
  %606 = vrot.lane.b32.xlu0 0, 127
  %v607 = vpop.permute.xlu0 %606
  %608 = vrot.lane.b32.xlu0 %v257, 127
  %v609 = vpop.permute.xlu0 %608
  %610 = vrot.lane.b32.xlu0 %v258, 127
  %v611 = vpop.permute.xlu0 %610
  %612 = vrot.lane.b32.xlu0 %v259, 127
  %v613 = vpop.permute.xlu0 %612
  %614 = vrot.lane.b32.xlu0 %v260, 127
  %v615 = vpop.permute.xlu0 %614
  %616 = vrot.lane.b32.xlu0 %v261, 127
  %v617 = vpop.permute.xlu0 %616
  %618 = vrot.lane.b32.xlu0 %v262, 127
  %v619 = vpop.permute.xlu0 %618
  %620 = vrot.lane.b32.xlu0 %v263, 127
  %v621 = vpop.permute.xlu0 %620
  %622 = vrot.lane.b32.xlu0 %v264, 127
  %v623 = vpop.permute.xlu0 %622
  %v624 = vsel %vm361, %v607, %v609
  %v625 = vsel %vm361, %v609, %v611
  %v626 = vsel %vm361, %v611, %v613
  %v627 = vsel %vm361, %v613, %v615
  %v628 = vsel %vm361, %v607, %v617
  %v629 = vsel %vm361, %v617, %v619
  %v630 = vsel %vm361, %v619, %v621
  %v631 = vsel %vm361, %v621, %v623
  %640 = vrot.lane.b32.xlu0 0, 126
  %v641 = vpop.permute.xlu0 %640
  %642 = vrot.lane.b32.xlu0 %v317, 126
  %v643 = vpop.permute.xlu0 %642
  %644 = vrot.lane.b32.xlu0 %v318, 126
  %v645 = vpop.permute.xlu0 %644
  %646 = vrot.lane.b32.xlu0 %v319, 126
  %v647 = vpop.permute.xlu0 %646
  %648 = vrot.lane.b32.xlu0 %v320, 126
  %v649 = vpop.permute.xlu0 %648
  %650 = vrot.lane.b32.xlu0 %v321, 126
  %v651 = vpop.permute.xlu0 %650
  %652 = vrot.lane.b32.xlu0 %v322, 126
  %v653 = vpop.permute.xlu0 %652
  %654 = vrot.lane.b32.xlu0 %v323, 126
  %v655 = vpop.permute.xlu0 %654
  %656 = vrot.lane.b32.xlu0 %v324, 126
  %v657 = vpop.permute.xlu0 %656
  %vm658 = vcmask 1031168
  %v659 = vsel %vm658, %v641, %v643
  %v660 = vsel %vm658, %v643, %v645
  %v661 = vsel %vm658, %v645, %v647
  %v662 = vsel %vm658, %v647, %v649
  %v663 = vsel %vm658, %v641, %v651
  %v664 = vsel %vm658, %v651, %v653
  %v665 = vsel %vm658, %v653, %v655
  %v666 = vsel %vm658, %v655, %v657
  %675 = vrot.lane.b32.xlu0 0, 112
  %v676 = vpop.permute.xlu0 %675
  %677 = vrot.lane.b32.xlu0 %v369, 112
  %v678 = vpop.permute.xlu0 %677
  %679 = vrot.lane.b32.xlu0 %v370, 112
  %v680 = vpop.permute.xlu0 %679
  %681 = vrot.lane.b32.xlu0 %v371, 112
  %v682 = vpop.permute.xlu0 %681
  %683 = vrot.lane.b32.xlu0 %v372, 112
  %v684 = vpop.permute.xlu0 %683
  %685 = vrot.lane.b32.xlu0 %v373, 112
  %v686 = vpop.permute.xlu0 %685
  %687 = vrot.lane.b32.xlu0 %v374, 112
  %v688 = vpop.permute.xlu0 %687
  %689 = vrot.lane.b32.xlu0 %v375, 112
  %v690 = vpop.permute.xlu0 %689
  %691 = vrot.lane.b32.xlu0 %v376, 112
  %v692 = vpop.permute.xlu0 %691
  %v693 = vsel %vm249, %v676, %v678
  %v694 = vsel %vm249, %v678, %v680
  %v695 = vsel %vm249, %v680, %v682
  %v696 = vsel %vm249, %v682, %v684
  %v697 = vsel %vm249, %v676, %v686
  %v698 = vsel %vm249, %v686, %v688
  %v699 = vsel %vm249, %v688, %v690
  %v700 = vsel %vm249, %v690, %v692
  %709 = vrot.lane.b32.xlu0 %v40, 111
  %v710 = vpop.permute.xlu0 %709
  %711 = vrot.lane.b32.xlu0 %v41, 111
  %v712 = vpop.permute.xlu0 %711
  %713 = vrot.lane.b32.xlu0 %v42, 111
  %v714 = vpop.permute.xlu0 %713
  %715 = vrot.lane.b32.xlu0 %v43, 111
  %v716 = vpop.permute.xlu0 %715
  %717 = vrot.lane.b32.xlu0 %v44, 111
  %v718 = vpop.permute.xlu0 %717
  %719 = vrot.lane.b32.xlu0 %v45, 111
  %v720 = vpop.permute.xlu0 %719
  %721 = vrot.lane.b32.xlu0 %v46, 111
  %v722 = vpop.permute.xlu0 %721
  %723 = vrot.lane.b32.xlu0 %v47, 111
  %v724 = vpop.permute.xlu0 %723
  %v725 = vsel %vm197, %v710, %v712
  %v726 = vsel %vm197, %v712, %v714
  %v727 = vsel %vm197, %v714, %v716
  %v728 = vsel %vm197, %v718, %v720
  %v729 = vsel %vm197, %v720, %v722
  %v730 = vsel %vm197, %v722, %v724
  %739 = vrot.lane.b32.xlu0 %v421, 110
  %v740 = vpop.permute.xlu0 %739
  %741 = vrot.lane.b32.xlu0 %v422, 110
  %v742 = vpop.permute.xlu0 %741
  %743 = vrot.lane.b32.xlu0 %v423, 110
  %v744 = vpop.permute.xlu0 %743
  %745 = vrot.lane.b32.xlu0 %v424, 110
  %v746 = vpop.permute.xlu0 %745
  %747 = vrot.lane.b32.xlu0 0, 110
  %v748 = vpop.permute.xlu0 %747
  %749 = vrot.lane.b32.xlu0 %v425, 110
  %v750 = vpop.permute.xlu0 %749
  %751 = vrot.lane.b32.xlu0 %v426, 110
  %v752 = vpop.permute.xlu0 %751
  %753 = vrot.lane.b32.xlu0 %v427, 110
  %v754 = vpop.permute.xlu0 %753
  %755 = vrot.lane.b32.xlu0 %v428, 110
  %v756 = vpop.permute.xlu0 %755
  %vm757 = vcmask 900096
  %v758 = vsel %vm757, %v740, %v742
  %v759 = vsel %vm757, %v742, %v744
  %v760 = vsel %vm757, %v744, %v746
  %v761 = vsel %vm757, %v746, %v748
  %v762 = vsel %vm757, %v750, %v752
  %v763 = vsel %vm757, %v752, %v754
  %v764 = vsel %vm757, %v754, %v756
  %v765 = vsel %vm757, %v756, %v748
  %774 = vrot.lane.b32.xlu0 %v481, 96
  %v775 = vpop.permute.xlu0 %774
  %776 = vrot.lane.b32.xlu0 %v482, 96
  %v777 = vpop.permute.xlu0 %776
  %778 = vrot.lane.b32.xlu0 %v483, 96
  %v779 = vpop.permute.xlu0 %778
  %780 = vrot.lane.b32.xlu0 %v484, 96
  %v781 = vpop.permute.xlu0 %780
  %782 = vrot.lane.b32.xlu0 0, 96
  %v783 = vpop.permute.xlu0 %782
  %784 = vrot.lane.b32.xlu0 %v485, 96
  %v785 = vpop.permute.xlu0 %784
  %786 = vrot.lane.b32.xlu0 %v486, 96
  %v787 = vpop.permute.xlu0 %786
  %788 = vrot.lane.b32.xlu0 %v487, 96
  %v789 = vpop.permute.xlu0 %788
  %790 = vrot.lane.b32.xlu0 %v488, 96
  %v791 = vpop.permute.xlu0 %790
  %vm792 = vcmask 785408
  %v793 = vsel %vm792, %v775, %v777
  %v794 = vsel %vm792, %v777, %v779
  %v795 = vsel %vm792, %v779, %v781
  %v796 = vsel %vm792, %v781, %v783
  %v797 = vsel %vm792, %v785, %v787
  %v798 = vsel %vm792, %v787, %v789
  %v799 = vsel %vm792, %v789, %v791
  %v800 = vsel %vm792, %v791, %v783
  %809 = vrot.lane.b32.xlu0 %v533, 95
  %v810 = vpop.permute.xlu0 %809
  %811 = vrot.lane.b32.xlu0 %v534, 95
  %v812 = vpop.permute.xlu0 %811
  %813 = vrot.lane.b32.xlu0 %v535, 95
  %v814 = vpop.permute.xlu0 %813
  %815 = vrot.lane.b32.xlu0 %v536, 95
  %v816 = vpop.permute.xlu0 %815
  %817 = vrot.lane.b32.xlu0 0, 95
  %v818 = vpop.permute.xlu0 %817
  %819 = vrot.lane.b32.xlu0 %v537, 95
  %v820 = vpop.permute.xlu0 %819
  %821 = vrot.lane.b32.xlu0 %v538, 95
  %v822 = vpop.permute.xlu0 %821
  %823 = vrot.lane.b32.xlu0 %v539, 95
  %v824 = vpop.permute.xlu0 %823
  %825 = vrot.lane.b32.xlu0 %v540, 95
  %v826 = vpop.permute.xlu0 %825
  %vm827 = vcmask 777216
  %v828 = vsel %vm827, %v810, %v812
  %v829 = vsel %vm827, %v812, %v814
  %v830 = vsel %vm827, %v814, %v816
  %v831 = vsel %vm827, %v816, %v818
  %v832 = vsel %vm827, %v820, %v822
  %v833 = vsel %vm827, %v822, %v824
  %v834 = vsel %vm827, %v824, %v826
  %v835 = vsel %vm827, %v826, %v818
  %844 = vrot.lane.b32.xlu0 %v589, 94
  %v845 = vpop.permute.xlu0 %844
  %846 = vrot.lane.b32.xlu0 %v590, 94
  %v847 = vpop.permute.xlu0 %846
  %848 = vrot.lane.b32.xlu0 %v591, 94
  %v849 = vpop.permute.xlu0 %848
  %850 = vrot.lane.b32.xlu0 %v592, 94
  %v851 = vpop.permute.xlu0 %850
  %852 = vrot.lane.b32.xlu0 0, 94
  %v853 = vpop.permute.xlu0 %852
  %854 = vrot.lane.b32.xlu0 %v593, 94
  %v855 = vpop.permute.xlu0 %854
  %856 = vrot.lane.b32.xlu0 %v594, 94
  %v857 = vpop.permute.xlu0 %856
  %858 = vrot.lane.b32.xlu0 %v595, 94
  %v859 = vpop.permute.xlu0 %858
  %860 = vrot.lane.b32.xlu0 %v596, 94
  %v861 = vpop.permute.xlu0 %860
  %vm862 = vcmask 769024
  %v863 = vsel %vm862, %v845, %v847
  %v864 = vsel %vm862, %v847, %v849
  %v865 = vsel %vm862, %v849, %v851
  %v866 = vsel %vm862, %v851, %v853
  %v867 = vsel %vm862, %v855, %v857
  %v868 = vsel %vm862, %v857, %v859
  %v869 = vsel %vm862, %v859, %v861
  %v870 = vsel %vm862, %v861, %v853
  %v871 = vld [vmem:[%s1] sm:$0xff]
  %v872 = vld [vmem:[%s1 + $0x8] sm:$0xf]
  %v873 = vld [vmem:[%s1 + $0xc] sm:$0xff]
  %v874 = vld [vmem:[%s1 + $0x14] sm:$0xf]
  %v875 = vld [vmem:[%s1 + $0x18] sm:$0xff]
  %v876 = vld [vmem:[%s1 + $0x20] sm:$0xf]
  %v877 = vld [vmem:[%s1 + $0x24] sm:$0xff]
  %v878 = vld [vmem:[%s1 + $0x2c] sm:$0xf]
  %v879 = vld [vmem:[%s1 + $0x30] sm:$0xff]
  %v880 = vld [vmem:[%s1 + $0x38] sm:$0xf]
  %v881 = vld [vmem:[%s1 + $0x3c] sm:$0xff]
  %v882 = vld [vmem:[%s1 + $0x44] sm:$0xf]
  %v883 = vld [vmem:[%s1 + $0x48] sm:$0xff]
  %v884 = vld [vmem:[%s1 + $0x50] sm:$0xf]
  %v885 = vld [vmem:[%s1 + $0x54] sm:$0xff]
  %v886 = vld [vmem:[%s1 + $0x5c] sm:$0xf]
  %v887 = vld [vmem:[%s1 + $0x60] sm:$0xff]
  %v888 = vld [vmem:[%s1 + $0x68] sm:$0xf]
  %v889 = vld [vmem:[%s1 + $0x6c] sm:$0xff]
  %v890 = vld [vmem:[%s1 + $0x74] sm:$0xf]
  %v891 = vld [vmem:[%s1 + $0x78] sm:$0xff]
  %v892 = vld [vmem:[%s1 + $0x80] sm:$0xf]
  %v893 = vld [vmem:[%s1 + $0x84] sm:$0xff]
  %v894 = vld [vmem:[%s1 + $0x8c] sm:$0xf]
  %v895 = vld [vmem:[%s2] sm:$0xff]
  %v896 = vld [vmem:[%s2 + $0x8] sm:$0xff]
  %v897 = vld [vmem:[%s2 + $0x10] sm:$0xff]
  %v898 = vld [vmem:[%s2 + $0x18] sm:$0xff]
  %v899 = vld [vmem:[%s2 + $0x20] sm:$0xff]
  %v900 = vld [vmem:[%s2 + $0x28] sm:$0xff]
  %v901 = vld [vmem:[%s2 + $0x30] sm:$0xff]
  %v902 = vld [vmem:[%s2 + $0x38] sm:$0xff]
  %v903 = vld [vmem:[%s2 + $0x40] sm:$0xff]
  %v904 = vld [vmem:[%s2 + $0x48] sm:$0xff]
  %v905 = vld [vmem:[%s2 + $0x50] sm:$0xff]
  %v906 = vld [vmem:[%s2 + $0x58] sm:$0xff]
  %908 = vset.pattern.permute.xlu0 0
  %909 = vperm.xlu0 %908, %v895
  %v910 = vpop.permute.xlu0 %909
  %913 = vset.pattern.permute.xlu0 0
  %914 = vperm.xlu0 %913, %v896
  %v915 = vpop.permute.xlu0 %914
  %918 = vset.pattern.permute.xlu0 0
  %919 = vperm.xlu0 %918, %v897
  %v920 = vpop.permute.xlu0 %919
  %923 = vset.pattern.permute.xlu0 0
  %924 = vperm.xlu0 %923, %v898
  %v925 = vpop.permute.xlu0 %924
  %928 = vset.pattern.permute.xlu0 0
  %929 = vperm.xlu0 %928, %v899
  %v930 = vpop.permute.xlu0 %929
  %933 = vset.pattern.permute.xlu0 0
  %934 = vperm.xlu0 %933, %v900
  %v935 = vpop.permute.xlu0 %934
  %938 = vset.pattern.permute.xlu0 0
  %939 = vperm.xlu0 %938, %v901
  %v940 = vpop.permute.xlu0 %939
  %943 = vset.pattern.permute.xlu0 0
  %944 = vperm.xlu0 %943, %v902
  %v945 = vpop.permute.xlu0 %944
  %948 = vset.pattern.permute.xlu0 0
  %949 = vperm.xlu0 %948, %v903
  %v950 = vpop.permute.xlu0 %949
  %953 = vset.pattern.permute.xlu0 0
  %954 = vperm.xlu0 %953, %v904
  %v955 = vpop.permute.xlu0 %954
  %958 = vset.pattern.permute.xlu0 0
  %959 = vperm.xlu0 %958, %v905
  %v960 = vpop.permute.xlu0 %959
  %963 = vset.pattern.permute.xlu0 0
  %964 = vperm.xlu0 %963, %v906
  %v965 = vpop.permute.xlu0 %964
  %v991 = vunpack.c.l.b16 %v871
  %v992 = vunpack.c.h.b16 %v871
  %v993 = vunpack.c.l.b16 %v872
  %v994 = vunpack.c.l.b16 %v873
  %v995 = vunpack.c.h.b16 %v873
  %v996 = vunpack.c.l.b16 %v874
  %v997 = vunpack.c.l.b16 %v875
  %v998 = vunpack.c.h.b16 %v875
  %v999 = vunpack.c.l.b16 %v876
  %v1000 = vunpack.c.l.b16 %v877
  %v1001 = vunpack.c.h.b16 %v877
  %v1002 = vunpack.c.l.b16 %v878
  %v1003 = vunpack.c.l.b16 %v879
  %v1004 = vunpack.c.h.b16 %v879
  %v1005 = vunpack.c.l.b16 %v880
  %v1006 = vunpack.c.l.b16 %v881
  %v1007 = vunpack.c.h.b16 %v881
  %v1008 = vunpack.c.l.b16 %v882
  %v1009 = vunpack.c.l.b16 %v883
  %v1010 = vunpack.c.h.b16 %v883
  %v1011 = vunpack.c.l.b16 %v884
  %v1012 = vunpack.c.l.b16 %v885
  %v1013 = vunpack.c.h.b16 %v885
  %v1014 = vunpack.c.l.b16 %v886
  %v1015 = vunpack.c.l.b16 %v887
  %v1016 = vunpack.c.h.b16 %v887
  %v1017 = vunpack.c.l.b16 %v888
  %v1018 = vunpack.c.l.b16 %v889
  %v1019 = vunpack.c.h.b16 %v889
  %v1020 = vunpack.c.l.b16 %v890
  %v1021 = vunpack.c.l.b16 %v891
  %v1022 = vunpack.c.h.b16 %v891
  %v1023 = vunpack.c.l.b16 %v892
  %v1024 = vunpack.c.l.b16 %v893
  %v1025 = vunpack.c.h.b16 %v893
  %v1026 = vunpack.c.l.b16 %v894
  %v1027 = vpack.c.b16 %v994, %v991
  %v1028 = vpack.c.b16 %v995, %v992
  %v1029 = vpack.c.b16 %v996, %v993
  %v1030 = vpack.c.b16 %v1000, %v997
  %v1031 = vpack.c.b16 %v1001, %v998
  %v1032 = vpack.c.b16 %v1002, %v999
  %v1033 = vpack.c.b16 %v1006, %v1003
  %v1034 = vpack.c.b16 %v1007, %v1004
  %v1035 = vpack.c.b16 %v1008, %v1005
  %v1036 = vpack.c.b16 %v1012, %v1009
  %v1037 = vpack.c.b16 %v1013, %v1010
  %v1038 = vpack.c.b16 %v1014, %v1011
  %v1039 = vpack.c.b16 %v1018, %v1015
  %v1040 = vpack.c.b16 %v1019, %v1016
  %v1041 = vpack.c.b16 %v1020, %v1017
  %v1042 = vpack.c.b16 %v1024, %v1021
  %v1043 = vpack.c.b16 %v1025, %v1022
  %v1044 = vpack.c.b16 %v1026, %v1023
  %1065 = vrot.lane.b32.xlu0 0, 17
  %v1066 = vpop.permute.xlu0 %1065
  %1067 = vrot.lane.b32.xlu0 %v205, 17
  %v1068 = vpop.permute.xlu0 %1067
  %1069 = vrot.lane.b32.xlu0 %v206, 17
  %v1070 = vpop.permute.xlu0 %1069
  %1071 = vrot.lane.b32.xlu0 %v207, 17
  %v1072 = vpop.permute.xlu0 %1071
  %1073 = vrot.lane.b32.xlu0 %v208, 17
  %v1074 = vpop.permute.xlu0 %1073
  %1075 = vrot.lane.b32.xlu0 %v209, 17
  %v1076 = vpop.permute.xlu0 %1075
  %1077 = vrot.lane.b32.xlu0 %v210, 17
  %v1078 = vpop.permute.xlu0 %1077
  %1079 = vrot.lane.b32.xlu0 %v211, 17
  %v1080 = vpop.permute.xlu0 %1079
  %1081 = vrot.lane.b32.xlu0 %v212, 17
  %v1082 = vpop.permute.xlu0 %1081
  %1083 = vrot.lane.b32.xlu0 %v624, 17
  %v1084 = vpop.permute.xlu0 %1083
  %1085 = vrot.lane.b32.xlu0 %v625, 17
  %v1086 = vpop.permute.xlu0 %1085
  %1087 = vrot.lane.b32.xlu0 %v626, 17
  %v1088 = vpop.permute.xlu0 %1087
  %1089 = vrot.lane.b32.xlu0 %v627, 17
  %v1090 = vpop.permute.xlu0 %1089
  %1091 = vrot.lane.b32.xlu0 %v615, 17
  %v1092 = vpop.permute.xlu0 %1091
  %1093 = vrot.lane.b32.xlu0 %v628, 17
  %v1094 = vpop.permute.xlu0 %1093
  %1095 = vrot.lane.b32.xlu0 %v629, 17
  %v1096 = vpop.permute.xlu0 %1095
  %1097 = vrot.lane.b32.xlu0 %v630, 17
  %v1098 = vpop.permute.xlu0 %1097
  %1099 = vrot.lane.b32.xlu0 %v631, 17
  %v1100 = vpop.permute.xlu0 %1099
  %1101 = vrot.lane.b32.xlu0 %v623, 17
  %v1102 = vpop.permute.xlu0 %1101
  %1103 = vrot.lane.b32.xlu0 %v659, 17
  %v1104 = vpop.permute.xlu0 %1103
  %1105 = vrot.lane.b32.xlu0 %v660, 17
  %v1106 = vpop.permute.xlu0 %1105
  %1107 = vrot.lane.b32.xlu0 %v661, 17
  %v1108 = vpop.permute.xlu0 %1107
  %1109 = vrot.lane.b32.xlu0 %v662, 17
  %v1110 = vpop.permute.xlu0 %1109
  %1111 = vrot.lane.b32.xlu0 %v649, 17
  %v1112 = vpop.permute.xlu0 %1111
  %1113 = vrot.lane.b32.xlu0 %v663, 17
  %v1114 = vpop.permute.xlu0 %1113
  %1115 = vrot.lane.b32.xlu0 %v664, 17
  %v1116 = vpop.permute.xlu0 %1115
  %1117 = vrot.lane.b32.xlu0 %v665, 17
  %v1118 = vpop.permute.xlu0 %1117
  %1119 = vrot.lane.b32.xlu0 %v666, 17
  %v1120 = vpop.permute.xlu0 %1119
  %1121 = vrot.lane.b32.xlu0 %v657, 17
  %v1122 = vpop.permute.xlu0 %1121
  %1123 = vrot.lane.b32.xlu0 %v693, 17
  %v1124 = vpop.permute.xlu0 %1123
  %1125 = vrot.lane.b32.xlu0 %v694, 17
  %v1126 = vpop.permute.xlu0 %1125
  %1127 = vrot.lane.b32.xlu0 %v695, 17
  %v1128 = vpop.permute.xlu0 %1127
  %1129 = vrot.lane.b32.xlu0 %v696, 17
  %v1130 = vpop.permute.xlu0 %1129
  %1131 = vrot.lane.b32.xlu0 %v684, 17
  %v1132 = vpop.permute.xlu0 %1131
  %1133 = vrot.lane.b32.xlu0 %v697, 17
  %v1134 = vpop.permute.xlu0 %1133
  %1135 = vrot.lane.b32.xlu0 %v698, 17
  %v1136 = vpop.permute.xlu0 %1135
  %1137 = vrot.lane.b32.xlu0 %v699, 17
  %v1138 = vpop.permute.xlu0 %1137
  %1139 = vrot.lane.b32.xlu0 %v700, 17
  %v1140 = vpop.permute.xlu0 %1139
  %1141 = vrot.lane.b32.xlu0 %v692, 17
  %v1142 = vpop.permute.xlu0 %1141
  %1143 = vrot.lane.b32.xlu0 %v710, 17
  %v1144 = vpop.permute.xlu0 %1143
  %1145 = vrot.lane.b32.xlu0 %v725, 17
  %v1146 = vpop.permute.xlu0 %1145
  %1147 = vrot.lane.b32.xlu0 %v726, 17
  %v1148 = vpop.permute.xlu0 %1147
  %1149 = vrot.lane.b32.xlu0 %v727, 17
  %v1150 = vpop.permute.xlu0 %1149
  %1151 = vrot.lane.b32.xlu0 %v716, 17
  %v1152 = vpop.permute.xlu0 %1151
  %1153 = vrot.lane.b32.xlu0 %v718, 17
  %v1154 = vpop.permute.xlu0 %1153
  %1155 = vrot.lane.b32.xlu0 %v728, 17
  %v1156 = vpop.permute.xlu0 %1155
  %1157 = vrot.lane.b32.xlu0 %v729, 17
  %v1158 = vpop.permute.xlu0 %1157
  %1159 = vrot.lane.b32.xlu0 %v730, 17
  %v1160 = vpop.permute.xlu0 %1159
  %1161 = vrot.lane.b32.xlu0 %v724, 17
  %v1162 = vpop.permute.xlu0 %1161
  %1163 = vrot.lane.b32.xlu0 %v740, 17
  %v1164 = vpop.permute.xlu0 %1163
  %1165 = vrot.lane.b32.xlu0 %v758, 17
  %v1166 = vpop.permute.xlu0 %1165
  %1167 = vrot.lane.b32.xlu0 %v759, 17
  %v1168 = vpop.permute.xlu0 %1167
  %1169 = vrot.lane.b32.xlu0 %v760, 17
  %v1170 = vpop.permute.xlu0 %1169
  %1171 = vrot.lane.b32.xlu0 %v761, 17
  %v1172 = vpop.permute.xlu0 %1171
  %1173 = vrot.lane.b32.xlu0 %v750, 17
  %v1174 = vpop.permute.xlu0 %1173
  %1175 = vrot.lane.b32.xlu0 %v762, 17
  %v1176 = vpop.permute.xlu0 %1175
  %1177 = vrot.lane.b32.xlu0 %v763, 17
  %v1178 = vpop.permute.xlu0 %1177
  %1179 = vrot.lane.b32.xlu0 %v764, 17
  %v1180 = vpop.permute.xlu0 %1179
  %1181 = vrot.lane.b32.xlu0 %v765, 17
  %v1182 = vpop.permute.xlu0 %1181
  %1183 = vrot.lane.b32.xlu0 %v775, 17
  %v1184 = vpop.permute.xlu0 %1183
  %1185 = vrot.lane.b32.xlu0 %v793, 17
  %v1186 = vpop.permute.xlu0 %1185
  %1187 = vrot.lane.b32.xlu0 %v794, 17
  %v1188 = vpop.permute.xlu0 %1187
  %1189 = vrot.lane.b32.xlu0 %v795, 17
  %v1190 = vpop.permute.xlu0 %1189
  %1191 = vrot.lane.b32.xlu0 %v796, 17
  %v1192 = vpop.permute.xlu0 %1191
  %1193 = vrot.lane.b32.xlu0 %v785, 17
  %v1194 = vpop.permute.xlu0 %1193
  %1195 = vrot.lane.b32.xlu0 %v797, 17
  %v1196 = vpop.permute.xlu0 %1195
  %1197 = vrot.lane.b32.xlu0 %v798, 17
  %v1198 = vpop.permute.xlu0 %1197
  %1199 = vrot.lane.b32.xlu0 %v799, 17
  %v1200 = vpop.permute.xlu0 %1199
  %1201 = vrot.lane.b32.xlu0 %v800, 17
  %v1202 = vpop.permute.xlu0 %1201
  %1203 = vrot.lane.b32.xlu0 %v810, 17
  %v1204 = vpop.permute.xlu0 %1203
  %1205 = vrot.lane.b32.xlu0 %v828, 17
  %v1206 = vpop.permute.xlu0 %1205
  %1207 = vrot.lane.b32.xlu0 %v829, 17
  %v1208 = vpop.permute.xlu0 %1207
  %1209 = vrot.lane.b32.xlu0 %v830, 17
  %v1210 = vpop.permute.xlu0 %1209
  %1211 = vrot.lane.b32.xlu0 %v831, 17
  %v1212 = vpop.permute.xlu0 %1211
  %1213 = vrot.lane.b32.xlu0 %v820, 17
  %v1214 = vpop.permute.xlu0 %1213
  %1215 = vrot.lane.b32.xlu0 %v832, 17
  %v1216 = vpop.permute.xlu0 %1215
  %1217 = vrot.lane.b32.xlu0 %v833, 17
  %v1218 = vpop.permute.xlu0 %1217
  %1219 = vrot.lane.b32.xlu0 %v834, 17
  %v1220 = vpop.permute.xlu0 %1219
  %1221 = vrot.lane.b32.xlu0 %v835, 17
  %v1222 = vpop.permute.xlu0 %1221
  %1223 = vrot.lane.b32.xlu0 %v845, 17
  %v1224 = vpop.permute.xlu0 %1223
  %1225 = vrot.lane.b32.xlu0 %v863, 17
  %v1226 = vpop.permute.xlu0 %1225
  %1227 = vrot.lane.b32.xlu0 %v864, 17
  %v1228 = vpop.permute.xlu0 %1227
  %1229 = vrot.lane.b32.xlu0 %v865, 17
  %v1230 = vpop.permute.xlu0 %1229
  %1231 = vrot.lane.b32.xlu0 %v866, 17
  %v1232 = vpop.permute.xlu0 %1231
  %1233 = vrot.lane.b32.xlu0 %v855, 17
  %v1234 = vpop.permute.xlu0 %1233
  %1235 = vrot.lane.b32.xlu0 %v867, 17
  %v1236 = vpop.permute.xlu0 %1235
  %1237 = vrot.lane.b32.xlu0 %v868, 17
  %v1238 = vpop.permute.xlu0 %1237
  %1239 = vrot.lane.b32.xlu0 %v869, 17
  %v1240 = vpop.permute.xlu0 %1239
  %1241 = vrot.lane.b32.xlu0 %v870, 17
  %v1242 = vpop.permute.xlu0 %1241
  %v1243 = vsel %vm581, %v1066, %v1068
  %v1244 = vsel %vm581, %v1068, %v1070
  %v1245 = vsel %vm581, %v1070, %v1072
  %v1246 = vsel %vm581, %v1072, %v1074
  %v1247 = vsel %vm581, %v1066, %v1076
  %v1248 = vsel %vm581, %v1076, %v1078
  %v1249 = vsel %vm581, %v1078, %v1080
  %v1250 = vsel %vm581, %v1080, %v1082
  %v1251 = vsel %vm581, %v1084, %v1086
  %v1252 = vsel %vm581, %v1086, %v1088
  %v1253 = vsel %vm581, %v1088, %v1090
  %v1254 = vsel %vm581, %v1090, %v1092
  %v1255 = vsel %vm581, %v1094, %v1096
  %v1256 = vsel %vm581, %v1096, %v1098
  %v1257 = vsel %vm581, %v1098, %v1100
  %v1258 = vsel %vm581, %v1100, %v1102
  %v1259 = vsel %vm581, %v1104, %v1106
  %v1260 = vsel %vm581, %v1106, %v1108
  %v1261 = vsel %vm581, %v1108, %v1110
  %v1262 = vsel %vm581, %v1110, %v1112
  %v1263 = vsel %vm581, %v1114, %v1116
  %v1264 = vsel %vm581, %v1116, %v1118
  %v1265 = vsel %vm581, %v1118, %v1120
  %v1266 = vsel %vm581, %v1120, %v1122
  %v1267 = vsel %vm581, %v1124, %v1126
  %v1268 = vsel %vm581, %v1126, %v1128
  %v1269 = vsel %vm581, %v1128, %v1130
  %v1270 = vsel %vm581, %v1130, %v1132
  %v1271 = vsel %vm581, %v1134, %v1136
  %v1272 = vsel %vm581, %v1136, %v1138
  %v1273 = vsel %vm581, %v1138, %v1140
  %v1274 = vsel %vm581, %v1140, %v1142
  %v1275 = vsel %vm581, %v1144, %v1146
  %v1276 = vsel %vm581, %v1146, %v1148
  %v1277 = vsel %vm581, %v1148, %v1150
  %v1278 = vsel %vm581, %v1150, %v1152
  %v1279 = vsel %vm581, %v1154, %v1156
  %v1280 = vsel %vm581, %v1156, %v1158
  %v1281 = vsel %vm581, %v1158, %v1160
  %v1282 = vsel %vm581, %v1160, %v1162
  %v1283 = vsel %vm581, %v1164, %v1166
  %v1284 = vsel %vm581, %v1166, %v1168
  %v1285 = vsel %vm581, %v1168, %v1170
  %v1286 = vsel %vm581, %v1170, %v1172
  %v1287 = vsel %vm581, %v1174, %v1176
  %v1288 = vsel %vm581, %v1176, %v1178
  %v1289 = vsel %vm581, %v1178, %v1180
  %v1290 = vsel %vm581, %v1180, %v1182
  %v1291 = vsel %vm581, %v1184, %v1186
  %v1292 = vsel %vm581, %v1186, %v1188
  %v1293 = vsel %vm581, %v1188, %v1190
  %v1294 = vsel %vm581, %v1190, %v1192
  %v1295 = vsel %vm581, %v1194, %v1196
  %v1296 = vsel %vm581, %v1196, %v1198
  %v1297 = vsel %vm581, %v1198, %v1200
  %v1298 = vsel %vm581, %v1200, %v1202
  %v1299 = vsel %vm581, %v1204, %v1206
  %v1300 = vsel %vm581, %v1206, %v1208
  %v1301 = vsel %vm581, %v1208, %v1210
  %v1302 = vsel %vm581, %v1210, %v1212
  %v1303 = vsel %vm581, %v1214, %v1216
  %v1304 = vsel %vm581, %v1216, %v1218
  %v1305 = vsel %vm581, %v1218, %v1220
  %v1306 = vsel %vm581, %v1220, %v1222
  %v1307 = vsel %vm581, %v1224, %v1226
  %v1308 = vsel %vm581, %v1226, %v1228
  %v1309 = vsel %vm581, %v1228, %v1230
  %v1310 = vsel %vm581, %v1230, %v1232
  %v1311 = vsel %vm581, %v1234, %v1236
  %v1312 = vsel %vm581, %v1236, %v1238
  %v1313 = vsel %vm581, %v1238, %v1240
  %v1314 = vsel %vm581, %v1240, %v1242
  %vm1387 = vcmask 261120
  %v1389 = vsel %vm1387, %v1029, 0
  %v1392 = vsel %vm1387, %v1032, 0
  %v1395 = vsel %vm1387, %v1035, 0
  %v1398 = vsel %vm1387, %v1038, 0
  %v1401 = vsel %vm1387, %v1041, 0
  %v1404 = vsel %vm1387, %v1044, 0
  %1406 = vmatprep.subr.bf16.mxu0 %v1272
  %1407 = vmatpush1.bf16.msra.mxu0 %v1271
  %1408 = vmatprep.subr.bf16.mxu0 %v1268
  %1409 = vmatpush1.bf16.msra.mxu0 %v1267
  %1410 = vmatprep.subr.bf16.mxu0 %v1264
  %1411 = vmatpush1.bf16.msra.mxu0 %v1263
  %1412 = vmatprep.subr.bf16.mxu0 %v1260
  %1413 = vmatpush1.bf16.msra.mxu0 %v1259
  %1414 = vmatprep.subr.bf16.mxu0 %v1256
  %1415 = vmatpush1.bf16.msra.mxu0 %v1255
  %1416 = vmatprep.subr.bf16.mxu0 %v1252
  %1417 = vmatpush1.bf16.msra.mxu0 %v1251
  %1418 = vmatprep.subr.bf16.mxu0 %v1248
  %1419 = vmatpush1.bf16.msra.mxu0 %v1247
  %1420 = vmatprep.subr.bf16.mxu0 %v1244
  %1421 = vmatpush1.bf16.msra.mxu0 %v1243
  %1422 = vmatprep.subr.bf16.mxu0 %v1304
  %1423 = vmatpush2.bf16.msra.mxu0 %v1303
  %1424 = vmatprep.subr.bf16.mxu0 %v1300
  %1425 = vmatpush2.bf16.msra.mxu0 %v1299
  %1426 = vmatprep.subr.bf16.mxu0 %v1296
  %1427 = vmatpush2.bf16.msra.mxu0 %v1295
  %1428 = vmatprep.subr.bf16.mxu0 %v1292
  %1429 = vmatpush2.bf16.msra.mxu0 %v1291
  %1430 = vmatprep.subr.bf16.mxu0 %v1288
  %1431 = vmatpush2.bf16.msra.mxu0 %v1287
  %1432 = vmatprep.subr.bf16.mxu0 %v1284
  %1433 = vmatpush2.bf16.msra.mxu0 %v1283
  %1434 = vmatprep.subr.bf16.mxu0 %v1280
  %1435 = vmatpush2.bf16.msra.mxu0 %v1279
  %1436 = vmatprep.subr.bf16.mxu0 %v1276
  %1437 = vmatpush2.bf16.msra.mxu0 %v1275
  %1438 = vmatprep.mubr.bf16.mxu0 %v1028
  %1439 = vmatmul.mubr.bf16.gmra.mxu0 %v1027
  %v1440 = vpop.f32.mrf.mxu0
  %v1441 = vadd.f32 %v910, %v1440
  %v1442 = vpop.f32.mrf.mxu0
  %v1443 = vadd.f32 %v910, %v1442
  %v1444 = vpop.f32.mrf.mxu0
  %v1445 = vadd.f32 %v915, %v1444
  %v1446 = vpop.f32.mrf.mxu0
  %v1447 = vadd.f32 %v915, %v1446
  %1448 = vmatprep.mubr.bf16.mxu0 %v1031
  %1449 = vmatmul.mubr.bf16.gmra.mxu0 %v1030
  %v1450 = vpop.f32.mrf.mxu0
  %v1451 = vadd.f32 %v920, %v1450
  %v1452 = vpop.f32.mrf.mxu0
  %v1453 = vadd.f32 %v920, %v1452
  %v1454 = vpop.f32.mrf.mxu0
  %v1455 = vadd.f32 %v925, %v1454
  %v1456 = vpop.f32.mrf.mxu0
  %v1457 = vadd.f32 %v925, %v1456
  %1458 = vmatprep.mubr.bf16.mxu0 %v1034
  %1459 = vmatmul.mubr.bf16.gmra.mxu0 %v1033
  %v1460 = vpop.f32.mrf.mxu0
  %v1461 = vadd.f32 %v930, %v1460
  %v1462 = vpop.f32.mrf.mxu0
  %v1463 = vadd.f32 %v930, %v1462
  %v1464 = vpop.f32.mrf.mxu0
  %v1465 = vadd.f32 %v935, %v1464
  %v1466 = vpop.f32.mrf.mxu0
  %v1467 = vadd.f32 %v935, %v1466
  %1468 = vmatprep.mubr.bf16.mxu0 %v1037
  %1469 = vmatmul.mubr.bf16.gmra.mxu0 %v1036
  %v1470 = vpop.f32.mrf.mxu0
  %v1471 = vadd.f32 %v940, %v1470
  %v1472 = vpop.f32.mrf.mxu0
  %v1473 = vadd.f32 %v940, %v1472
  %v1474 = vpop.f32.mrf.mxu0
  %v1475 = vadd.f32 %v945, %v1474
  %v1476 = vpop.f32.mrf.mxu0
  %v1477 = vadd.f32 %v945, %v1476
  %1478 = vmatprep.mubr.bf16.mxu0 %v1040
  %1479 = vmatmul.mubr.bf16.gmra.mxu0 %v1039
  %v1480 = vpop.f32.mrf.mxu0
  %v1481 = vadd.f32 %v950, %v1480
  %v1482 = vpop.f32.mrf.mxu0
  %v1483 = vadd.f32 %v950, %v1482
  %v1484 = vpop.f32.mrf.mxu0
  %v1485 = vadd.f32 %v955, %v1484
  %v1486 = vpop.f32.mrf.mxu0
  %v1487 = vadd.f32 %v955, %v1486
  %1488 = vmatprep.mubr.bf16.mxu0 %v1043
  %1489 = vmatmul.mubr.bf16.gmra.mxu0 %v1042
  %v1490 = vpop.f32.mrf.mxu0
  %v1491 = vadd.f32 %v960, %v1490
  %v1492 = vpop.f32.mrf.mxu0
  %v1493 = vadd.f32 %v960, %v1492
  %v1494 = vpop.f32.mrf.mxu0
  %v1495 = vadd.f32 %v965, %v1494
  %v1496 = vpop.f32.mrf.mxu0
  %v1497 = vadd.f32 %v965, %v1496
  %1498 = vdwg.mxu0
  %1499 = vmatprep.subr.bf16.mxu0 0
  %1500 = vmatpush1.bf16.msra.mxu0 0
  %1501 = vmatprep.subr.bf16.mxu0 0
  %1502 = vmatpush1.bf16.msra.mxu0 0
  %1503 = vmatprep.subr.bf16.mxu0 0
  %1504 = vmatpush1.bf16.msra.mxu0 0
  %1505 = vmatprep.subr.bf16.mxu0 0
  %1506 = vmatpush1.bf16.msra.mxu0 0
  %1507 = vmatprep.subr.bf16.mxu0 0
  %1508 = vmatpush1.bf16.msra.mxu0 0
  %1509 = vmatprep.subr.bf16.mxu0 0
  %1510 = vmatpush1.bf16.msra.mxu0 0
  %1511 = vmatprep.subr.bf16.mxu0 %v1312
  %1512 = vmatpush1.bf16.msra.mxu0 %v1311
  %1513 = vmatprep.subr.bf16.mxu0 %v1308
  %1514 = vmatpush1.bf16.msra.mxu0 %v1307
  %1515 = vmatprep.subr.bf16.mxu0 0
  %1516 = vmatpush2.bf16.msra.mxu0 0
  %1517 = vmatprep.subr.bf16.mxu0 0
  %1518 = vmatpush2.bf16.msra.mxu0 0
  %1519 = vmatprep.subr.bf16.mxu0 0
  %1520 = vmatpush2.bf16.msra.mxu0 0
  %1521 = vmatprep.subr.bf16.mxu0 0
  %1522 = vmatpush2.bf16.msra.mxu0 0
  %1523 = vmatprep.subr.bf16.mxu0 0
  %1524 = vmatpush2.bf16.msra.mxu0 0
  %1525 = vmatprep.subr.bf16.mxu0 0
  %1526 = vmatpush2.bf16.msra.mxu0 0
  %1527 = vmatprep.subr.bf16.mxu0 0
  %1528 = vmatpush2.bf16.msra.mxu0 0
  %1529 = vmatprep.subr.bf16.mxu0 0
  %1530 = vmatpush2.bf16.msra.mxu0 0
  %1531 = vmatprep.mubr.bf16.mxu0 0
  %1532 = vmatmul.mubr.bf16.gmra.mxu0 %v1389
  %v1533 = vpop.f32.mrf.mxu0
  %v1534 = vadd.f32 %v1441, %v1533
  %v1535 = vpop.f32.mrf.mxu0
  %v1536 = vadd.f32 %v1443, %v1535
  %v1537 = vpop.f32.mrf.mxu0
  %v1538 = vadd.f32 %v1445, %v1537
  %v1539 = vpop.f32.mrf.mxu0
  %v1540 = vadd.f32 %v1447, %v1539
  %1541 = vmatprep.mubr.bf16.mxu0 0
  %1542 = vmatmul.mubr.bf16.gmra.mxu0 %v1392
  %v1543 = vpop.f32.mrf.mxu0
  %v1544 = vadd.f32 %v1451, %v1543
  %v1545 = vpop.f32.mrf.mxu0
  %v1546 = vadd.f32 %v1453, %v1545
  %v1547 = vpop.f32.mrf.mxu0
  %v1548 = vadd.f32 %v1455, %v1547
  %v1549 = vpop.f32.mrf.mxu0
  %v1550 = vadd.f32 %v1457, %v1549
  %1551 = vmatprep.mubr.bf16.mxu0 0
  %1552 = vmatmul.mubr.bf16.gmra.mxu0 %v1395
  %v1553 = vpop.f32.mrf.mxu0
  %v1554 = vadd.f32 %v1461, %v1553
  %v1555 = vpop.f32.mrf.mxu0
  %v1556 = vadd.f32 %v1463, %v1555
  %v1557 = vpop.f32.mrf.mxu0
  %v1558 = vadd.f32 %v1465, %v1557
  %v1559 = vpop.f32.mrf.mxu0
  %v1560 = vadd.f32 %v1467, %v1559
  %1561 = vmatprep.mubr.bf16.mxu0 0
  %1562 = vmatmul.mubr.bf16.gmra.mxu0 %v1398
  %v1563 = vpop.f32.mrf.mxu0
  %v1564 = vadd.f32 %v1471, %v1563
  %v1565 = vpop.f32.mrf.mxu0
  %v1566 = vadd.f32 %v1473, %v1565
  %v1567 = vpop.f32.mrf.mxu0
  %v1568 = vadd.f32 %v1475, %v1567
  %v1569 = vpop.f32.mrf.mxu0
  %v1570 = vadd.f32 %v1477, %v1569
  %1571 = vmatprep.mubr.bf16.mxu0 0
  %1572 = vmatmul.mubr.bf16.gmra.mxu0 %v1401
  %v1573 = vpop.f32.mrf.mxu0
  %v1574 = vadd.f32 %v1481, %v1573
  %v1575 = vpop.f32.mrf.mxu0
  %v1576 = vadd.f32 %v1483, %v1575
  %v1577 = vpop.f32.mrf.mxu0
  %v1578 = vadd.f32 %v1485, %v1577
  %v1579 = vpop.f32.mrf.mxu0
  %v1580 = vadd.f32 %v1487, %v1579
  %1581 = vmatprep.mubr.bf16.mxu0 0
  %1582 = vmatmul.mubr.bf16.gmra.mxu0 %v1404
  %v1583 = vpop.f32.mrf.mxu0
  %v1584 = vadd.f32 %v1491, %v1583
  %v1585 = vpop.f32.mrf.mxu0
  %v1586 = vadd.f32 %v1493, %v1585
  %v1587 = vpop.f32.mrf.mxu0
  %v1588 = vadd.f32 %v1495, %v1587
  %v1589 = vpop.f32.mrf.mxu0
  %v1590 = vadd.f32 %v1497, %v1589
  %1591 = vdwg.mxu0
  %1592 = vmatprep.subr.bf16.mxu0 %v1274
  %1593 = vmatpush1.bf16.msra.mxu0 %v1273
  %1594 = vmatprep.subr.bf16.mxu0 %v1270
  %1595 = vmatpush1.bf16.msra.mxu0 %v1269
  %1596 = vmatprep.subr.bf16.mxu0 %v1266
  %1597 = vmatpush1.bf16.msra.mxu0 %v1265
  %1598 = vmatprep.subr.bf16.mxu0 %v1262
  %1599 = vmatpush1.bf16.msra.mxu0 %v1261
  %1600 = vmatprep.subr.bf16.mxu0 %v1258
  %1601 = vmatpush1.bf16.msra.mxu0 %v1257
  %1602 = vmatprep.subr.bf16.mxu0 %v1254
  %1603 = vmatpush1.bf16.msra.mxu0 %v1253
  %1604 = vmatprep.subr.bf16.mxu0 %v1250
  %1605 = vmatpush1.bf16.msra.mxu0 %v1249
  %1606 = vmatprep.subr.bf16.mxu0 %v1246
  %1607 = vmatpush1.bf16.msra.mxu0 %v1245
  %1608 = vmatprep.subr.bf16.mxu0 %v1306
  %1609 = vmatpush2.bf16.msra.mxu0 %v1305
  %1610 = vmatprep.subr.bf16.mxu0 %v1302
  %1611 = vmatpush2.bf16.msra.mxu0 %v1301
  %1612 = vmatprep.subr.bf16.mxu0 %v1298
  %1613 = vmatpush2.bf16.msra.mxu0 %v1297
  %1614 = vmatprep.subr.bf16.mxu0 %v1294
  %1615 = vmatpush2.bf16.msra.mxu0 %v1293
  %1616 = vmatprep.subr.bf16.mxu0 %v1290
  %1617 = vmatpush2.bf16.msra.mxu0 %v1289
  %1618 = vmatprep.subr.bf16.mxu0 %v1286
  %1619 = vmatpush2.bf16.msra.mxu0 %v1285
  %1620 = vmatprep.subr.bf16.mxu0 %v1282
  %1621 = vmatpush2.bf16.msra.mxu0 %v1281
  %1622 = vmatprep.subr.bf16.mxu0 %v1278
  %1623 = vmatpush2.bf16.msra.mxu0 %v1277
  %1624 = vmatprep.mubr.bf16.mxu0 %v1028
  %1625 = vmatmul.mubr.bf16.gmra.mxu0 %v1027
  %v1626 = vpop.f32.mrf.mxu0
  %v1627 = vadd.f32 %v910, %v1626
  %v1628 = vpop.f32.mrf.mxu0
  %v1629 = vadd.f32 %v910, %v1628
  %v1630 = vpop.f32.mrf.mxu0
  %v1631 = vadd.f32 %v915, %v1630
  %v1632 = vpop.f32.mrf.mxu0
  %v1633 = vadd.f32 %v915, %v1632
  %1634 = vmatprep.mubr.bf16.mxu0 %v1031
  %1635 = vmatmul.mubr.bf16.gmra.mxu0 %v1030
  %v1636 = vpop.f32.mrf.mxu0
  %v1637 = vadd.f32 %v920, %v1636
  %v1638 = vpop.f32.mrf.mxu0
  %v1639 = vadd.f32 %v920, %v1638
  %v1640 = vpop.f32.mrf.mxu0
  %v1641 = vadd.f32 %v925, %v1640
  %v1642 = vpop.f32.mrf.mxu0
  %v1643 = vadd.f32 %v925, %v1642
  %1644 = vmatprep.mubr.bf16.mxu0 %v1034
  %1645 = vmatmul.mubr.bf16.gmra.mxu0 %v1033
  %v1646 = vpop.f32.mrf.mxu0
  %v1647 = vadd.f32 %v930, %v1646
  %v1648 = vpop.f32.mrf.mxu0
  %v1649 = vadd.f32 %v930, %v1648
  %v1650 = vpop.f32.mrf.mxu0
  %v1651 = vadd.f32 %v935, %v1650
  %v1652 = vpop.f32.mrf.mxu0
  %v1653 = vadd.f32 %v935, %v1652
  %1654 = vmatprep.mubr.bf16.mxu0 %v1037
  %1655 = vmatmul.mubr.bf16.gmra.mxu0 %v1036
  %v1656 = vpop.f32.mrf.mxu0
  %v1657 = vadd.f32 %v940, %v1656
  %v1658 = vpop.f32.mrf.mxu0
  %v1659 = vadd.f32 %v940, %v1658
  %v1660 = vpop.f32.mrf.mxu0
  %v1661 = vadd.f32 %v945, %v1660
  %v1662 = vpop.f32.mrf.mxu0
  %v1663 = vadd.f32 %v945, %v1662
  %1664 = vmatprep.mubr.bf16.mxu0 %v1040
  %1665 = vmatmul.mubr.bf16.gmra.mxu0 %v1039
  %v1666 = vpop.f32.mrf.mxu0
  %v1667 = vadd.f32 %v950, %v1666
  %v1668 = vpop.f32.mrf.mxu0
  %v1669 = vadd.f32 %v950, %v1668
  %v1670 = vpop.f32.mrf.mxu0
  %v1671 = vadd.f32 %v955, %v1670
  %v1672 = vpop.f32.mrf.mxu0
  %v1673 = vadd.f32 %v955, %v1672
  %1674 = vmatprep.mubr.bf16.mxu0 %v1043
  %1675 = vmatmul.mubr.bf16.gmra.mxu0 %v1042
  %v1676 = vpop.f32.mrf.mxu0
  %v1677 = vadd.f32 %v960, %v1676
  %v1678 = vpop.f32.mrf.mxu0
  %v1679 = vadd.f32 %v960, %v1678
  %v1680 = vpop.f32.mrf.mxu0
  %v1681 = vadd.f32 %v965, %v1680
  %v1682 = vpop.f32.mrf.mxu0
  %v1683 = vadd.f32 %v965, %v1682
  %1684 = vdwg.mxu0
  %1685 = vmatprep.subr.bf16.mxu0 0
  %1686 = vmatpush1.bf16.msra.mxu0 0
  %1687 = vmatprep.subr.bf16.mxu0 0
  %1688 = vmatpush1.bf16.msra.mxu0 0
  %1689 = vmatprep.subr.bf16.mxu0 0
  %1690 = vmatpush1.bf16.msra.mxu0 0
  %1691 = vmatprep.subr.bf16.mxu0 0
  %1692 = vmatpush1.bf16.msra.mxu0 0
  %1693 = vmatprep.subr.bf16.mxu0 0
  %1694 = vmatpush1.bf16.msra.mxu0 0
  %1695 = vmatprep.subr.bf16.mxu0 0
  %1696 = vmatpush1.bf16.msra.mxu0 0
  %1697 = vmatprep.subr.bf16.mxu0 %v1314
  %1698 = vmatpush1.bf16.msra.mxu0 %v1313
  %1699 = vmatprep.subr.bf16.mxu0 %v1310
  %1700 = vmatpush1.bf16.msra.mxu0 %v1309
  %1701 = vmatprep.subr.bf16.mxu0 0
  %1702 = vmatpush2.bf16.msra.mxu0 0
  %1703 = vmatprep.subr.bf16.mxu0 0
  %1704 = vmatpush2.bf16.msra.mxu0 0
  %1705 = vmatprep.subr.bf16.mxu0 0
  %1706 = vmatpush2.bf16.msra.mxu0 0
  %1707 = vmatprep.subr.bf16.mxu0 0
  %1708 = vmatpush2.bf16.msra.mxu0 0
  %1709 = vmatprep.subr.bf16.mxu0 0
  %1710 = vmatpush2.bf16.msra.mxu0 0
  %1711 = vmatprep.subr.bf16.mxu0 0
  %1712 = vmatpush2.bf16.msra.mxu0 0
  %1713 = vmatprep.subr.bf16.mxu0 0
  %1714 = vmatpush2.bf16.msra.mxu0 0
  %1715 = vmatprep.subr.bf16.mxu0 0
  %1716 = vmatpush2.bf16.msra.mxu0 0
  %1717 = vmatprep.mubr.bf16.mxu0 0
  %1718 = vmatmul.mubr.bf16.gmra.mxu0 %v1389
  %v1719 = vpop.f32.mrf.mxu0
  %v1720 = vadd.f32 %v1627, %v1719
  %v1721 = vpop.f32.mrf.mxu0
  %v1722 = vadd.f32 %v1629, %v1721
  %v1723 = vpop.f32.mrf.mxu0
  %v1724 = vadd.f32 %v1631, %v1723
  %v1725 = vpop.f32.mrf.mxu0
  %v1726 = vadd.f32 %v1633, %v1725
  %1727 = vmatprep.mubr.bf16.mxu0 0
  %1728 = vmatmul.mubr.bf16.gmra.mxu0 %v1392
  %v1729 = vpop.f32.mrf.mxu0
  %v1730 = vadd.f32 %v1637, %v1729
  %v1731 = vpop.f32.mrf.mxu0
  %v1732 = vadd.f32 %v1639, %v1731
  %v1733 = vpop.f32.mrf.mxu0
  %v1734 = vadd.f32 %v1641, %v1733
  %v1735 = vpop.f32.mrf.mxu0
  %v1736 = vadd.f32 %v1643, %v1735
  %1737 = vmatprep.mubr.bf16.mxu0 0
  %1738 = vmatmul.mubr.bf16.gmra.mxu0 %v1395
  %v1739 = vpop.f32.mrf.mxu0
  %v1740 = vadd.f32 %v1647, %v1739
  %v1741 = vpop.f32.mrf.mxu0
  %v1742 = vadd.f32 %v1649, %v1741
  %v1743 = vpop.f32.mrf.mxu0
  %v1744 = vadd.f32 %v1651, %v1743
  %v1745 = vpop.f32.mrf.mxu0
  %v1746 = vadd.f32 %v1653, %v1745
  %1747 = vmatprep.mubr.bf16.mxu0 0
  %1748 = vmatmul.mubr.bf16.gmra.mxu0 %v1398
  %v1749 = vpop.f32.mrf.mxu0
  %v1750 = vadd.f32 %v1657, %v1749
  %v1751 = vpop.f32.mrf.mxu0
  %v1752 = vadd.f32 %v1659, %v1751
  %v1753 = vpop.f32.mrf.mxu0
  %v1754 = vadd.f32 %v1661, %v1753
  %v1755 = vpop.f32.mrf.mxu0
  %v1756 = vadd.f32 %v1663, %v1755
  %1757 = vmatprep.mubr.bf16.mxu0 0
  %1758 = vmatmul.mubr.bf16.gmra.mxu0 %v1401
  %v1759 = vpop.f32.mrf.mxu0
  %v1760 = vadd.f32 %v1667, %v1759
  %v1761 = vpop.f32.mrf.mxu0
  %v1762 = vadd.f32 %v1669, %v1761
  %v1763 = vpop.f32.mrf.mxu0
  %v1764 = vadd.f32 %v1671, %v1763
  %v1765 = vpop.f32.mrf.mxu0
  %v1766 = vadd.f32 %v1673, %v1765
  %1767 = vmatprep.mubr.bf16.mxu0 0
  %1768 = vmatmul.mubr.bf16.gmra.mxu0 %v1404
  %v1769 = vpop.f32.mrf.mxu0
  %v1770 = vadd.f32 %v1677, %v1769
  %v1771 = vpop.f32.mrf.mxu0
  %v1772 = vadd.f32 %v1679, %v1771
  %v1773 = vpop.f32.mrf.mxu0
  %v1774 = vadd.f32 %v1681, %v1773
  %v1775 = vpop.f32.mrf.mxu0
  %v1776 = vadd.f32 %v1683, %v1775
  %1777 = vdwg.mxu0
  %v1778 = vmax.f32 %v1534, 0.0
  %v1779 = vmax.f32 %v1536, 0.0
  %v1780 = vmax.f32 %v1720, 0.0
  %v1781 = vmax.f32 %v1722, 0.0
  %v1782 = vmax.f32 %v1538, 0.0
  %v1783 = vmax.f32 %v1540, 0.0
  %v1784 = vmax.f32 %v1724, 0.0
  %v1785 = vmax.f32 %v1726, 0.0
  %v1786 = vmax.f32 %v1544, 0.0
  %v1787 = vmax.f32 %v1546, 0.0
  %v1788 = vmax.f32 %v1730, 0.0
  %v1789 = vmax.f32 %v1732, 0.0
  %v1790 = vmax.f32 %v1548, 0.0
  %v1791 = vmax.f32 %v1550, 0.0
  %v1792 = vmax.f32 %v1734, 0.0
  %v1793 = vmax.f32 %v1736, 0.0
  %v1794 = vmax.f32 %v1554, 0.0
  %v1795 = vmax.f32 %v1556, 0.0
  %v1796 = vmax.f32 %v1740, 0.0
  %v1797 = vmax.f32 %v1742, 0.0
  %v1798 = vmax.f32 %v1558, 0.0
  %v1799 = vmax.f32 %v1560, 0.0
  %v1800 = vmax.f32 %v1744, 0.0
  %v1801 = vmax.f32 %v1746, 0.0
  %v1802 = vmax.f32 %v1564, 0.0
  %v1803 = vmax.f32 %v1566, 0.0
  %v1804 = vmax.f32 %v1750, 0.0
  %v1805 = vmax.f32 %v1752, 0.0
  %v1806 = vmax.f32 %v1568, 0.0
  %v1807 = vmax.f32 %v1570, 0.0
  %v1808 = vmax.f32 %v1754, 0.0
  %v1809 = vmax.f32 %v1756, 0.0
  %v1810 = vmax.f32 %v1574, 0.0
  %v1811 = vmax.f32 %v1576, 0.0
  %v1812 = vmax.f32 %v1760, 0.0
  %v1813 = vmax.f32 %v1762, 0.0
  %v1814 = vmax.f32 %v1578, 0.0
  %v1815 = vmax.f32 %v1580, 0.0
  %v1816 = vmax.f32 %v1764, 0.0
  %v1817 = vmax.f32 %v1766, 0.0
  %v1818 = vmax.f32 %v1584, 0.0
  %v1819 = vmax.f32 %v1586, 0.0
  %v1820 = vmax.f32 %v1770, 0.0
  %v1821 = vmax.f32 %v1772, 0.0
  %v1822 = vmax.f32 %v1588, 0.0
  %v1823 = vmax.f32 %v1590, 0.0
  %v1824 = vmax.f32 %v1774, 0.0
  %v1825 = vmax.f32 %v1776, 0.0
  %v1826 = vld [vmem:[%s3] sm:$0xff]
  %v1827 = vld [vmem:[%s4] sm:$0xff]
  %1829 = vset.pattern.permute.xlu0 0
  %1830 = vperm.xlu0 %1829, %v1827
  %v1831 = vpop.permute.xlu0 %1830
  %vm1833 = vcmask 785408
  %v1835 = vsel %vm1833, %v1826, 0
  %1837 = vmatprep.subr.mxu0 0.0
  %1838 = vmatpush1.msra.mxu0 0.0
  %1839 = vmatprep.subr.mxu0 0.0
  %1840 = vmatpush1.msra.mxu0 0.0
  %1841 = vmatprep.subr.mxu0 0.0
  %1842 = vmatpush1.msra.mxu0 0.0
  %1843 = vmatprep.subr.mxu0 0.0
  %1844 = vmatpush1.msra.mxu0 0.0
  %1845 = vmatprep.subr.mxu0 %v1823
  %1846 = vmatpush1.msra.mxu0 %v1822
  %1847 = vmatprep.subr.mxu0 %v1819
  %1848 = vmatpush1.msra.mxu0 %v1818
  %1849 = vmatprep.subr.mxu0 %v1815
  %1850 = vmatpush1.msra.mxu0 %v1814
  %1851 = vmatprep.subr.mxu0 %v1811
  %1852 = vmatpush1.msra.mxu0 %v1810
  %1853 = vmatprep.subr.mxu0 %v1807
  %1854 = vmatpush1.msra.mxu0 %v1806
  %1855 = vmatprep.subr.mxu0 %v1803
  %1856 = vmatpush1.msra.mxu0 %v1802
  %1857 = vmatprep.subr.mxu0 %v1799
  %1858 = vmatpush1.msra.mxu0 %v1798
  %1859 = vmatprep.subr.mxu0 %v1795
  %1860 = vmatpush1.msra.mxu0 %v1794
  %1861 = vmatprep.subr.mxu0 %v1791
  %1862 = vmatpush1.msra.mxu0 %v1790
  %1863 = vmatprep.subr.mxu0 %v1787
  %1864 = vmatpush1.msra.mxu0 %v1786
  %1865 = vmatprep.subr.mxu0 %v1783
  %1866 = vmatpush1.msra.mxu0 %v1782
  %1867 = vmatprep.subr.mxu0 %v1779
  %1868 = vmatpush1.msra.mxu0 %v1778
  %1869 = vmatprep.subr.mxu0 0.0
  %1870 = vmatpush2.msra.mxu0 0.0
  %1871 = vmatprep.subr.mxu0 0.0
  %1872 = vmatpush2.msra.mxu0 0.0
  %1873 = vmatprep.subr.mxu0 0.0
  %1874 = vmatpush2.msra.mxu0 0.0
  %1875 = vmatprep.subr.mxu0 0.0
  %1876 = vmatpush2.msra.mxu0 0.0
  %1877 = vmatprep.subr.mxu0 0.0
  %1878 = vmatpush2.msra.mxu0 0.0
  %1879 = vmatprep.subr.mxu0 0.0
  %1880 = vmatpush2.msra.mxu0 0.0
  %1881 = vmatprep.subr.mxu0 0.0
  %1882 = vmatpush2.msra.mxu0 0.0
  %1883 = vmatprep.subr.mxu0 0.0
  %1884 = vmatpush2.msra.mxu0 0.0
  %1885 = vmatprep.subr.mxu0 0.0
  %1886 = vmatpush2.msra.mxu0 0.0
  %1887 = vmatprep.subr.mxu0 0.0
  %1888 = vmatpush2.msra.mxu0 0.0
  %1889 = vmatprep.subr.mxu0 0.0
  %1890 = vmatpush2.msra.mxu0 0.0
  %1891 = vmatprep.subr.mxu0 0.0
  %1892 = vmatpush2.msra.mxu0 0.0
  %1893 = vmatprep.subr.mxu0 0.0
  %1894 = vmatpush2.msra.mxu0 0.0
  %1895 = vmatprep.subr.mxu0 0.0
  %1896 = vmatpush2.msra.mxu0 0.0
  %1897 = vmatprep.subr.mxu0 0.0
  %1898 = vmatpush2.msra.mxu0 0.0
  %1899 = vmatprep.subr.mxu0 0.0
  %1900 = vmatpush2.msra.mxu0 0.0
  %1901 = vmatprep.mubr.f32.mxu0 0.0
  %1902 = vmatmul.mubr.f32.gmra.mxu0 %v1835
  %v1903 = vpop.f32.mrf.mxu0
  %v1904 = vadd.f32 %v1831, %v1903
  %v1905 = vpop.f32.mrf.mxu0
  %v1906 = vadd.f32 %v1831, %v1905
  %1907 = vdwg.mxu0
  %1908 = vmatprep.subr.mxu0 0.0
  %1909 = vmatpush1.msra.mxu0 0.0
  %1910 = vmatprep.subr.mxu0 0.0
  %1911 = vmatpush1.msra.mxu0 0.0
  %1912 = vmatprep.subr.mxu0 0.0
  %1913 = vmatpush1.msra.mxu0 0.0
  %1914 = vmatprep.subr.mxu0 0.0
  %1915 = vmatpush1.msra.mxu0 0.0
  %1916 = vmatprep.subr.mxu0 %v1825
  %1917 = vmatpush1.msra.mxu0 %v1824
  %1918 = vmatprep.subr.mxu0 %v1821
  %1919 = vmatpush1.msra.mxu0 %v1820
  %1920 = vmatprep.subr.mxu0 %v1817
  %1921 = vmatpush1.msra.mxu0 %v1816
  %1922 = vmatprep.subr.mxu0 %v1813
  %1923 = vmatpush1.msra.mxu0 %v1812
  %1924 = vmatprep.subr.mxu0 %v1809
  %1925 = vmatpush1.msra.mxu0 %v1808
  %1926 = vmatprep.subr.mxu0 %v1805
  %1927 = vmatpush1.msra.mxu0 %v1804
  %1928 = vmatprep.subr.mxu0 %v1801
  %1929 = vmatpush1.msra.mxu0 %v1800
  %1930 = vmatprep.subr.mxu0 %v1797
  %1931 = vmatpush1.msra.mxu0 %v1796
  %1932 = vmatprep.subr.mxu0 %v1793
  %1933 = vmatpush1.msra.mxu0 %v1792
  %1934 = vmatprep.subr.mxu0 %v1789
  %1935 = vmatpush1.msra.mxu0 %v1788
  %1936 = vmatprep.subr.mxu0 %v1785
  %1937 = vmatpush1.msra.mxu0 %v1784
  %1938 = vmatprep.subr.mxu0 %v1781
  %1939 = vmatpush1.msra.mxu0 %v1780
  %1940 = vmatprep.subr.mxu0 0.0
  %1941 = vmatpush2.msra.mxu0 0.0
  %1942 = vmatprep.subr.mxu0 0.0
  %1943 = vmatpush2.msra.mxu0 0.0
  %1944 = vmatprep.subr.mxu0 0.0
  %1945 = vmatpush2.msra.mxu0 0.0
  %1946 = vmatprep.subr.mxu0 0.0
  %1947 = vmatpush2.msra.mxu0 0.0
  %1948 = vmatprep.subr.mxu0 0.0
  %1949 = vmatpush2.msra.mxu0 0.0
  %1950 = vmatprep.subr.mxu0 0.0
  %1951 = vmatpush2.msra.mxu0 0.0
  %1952 = vmatprep.subr.mxu0 0.0
  %1953 = vmatpush2.msra.mxu0 0.0
  %1954 = vmatprep.subr.mxu0 0.0
  %1955 = vmatpush2.msra.mxu0 0.0
  %1956 = vmatprep.subr.mxu0 0.0
  %1957 = vmatpush2.msra.mxu0 0.0
  %1958 = vmatprep.subr.mxu0 0.0
  %1959 = vmatpush2.msra.mxu0 0.0
  %1960 = vmatprep.subr.mxu0 0.0
  %1961 = vmatpush2.msra.mxu0 0.0
  %1962 = vmatprep.subr.mxu0 0.0
  %1963 = vmatpush2.msra.mxu0 0.0
  %1964 = vmatprep.subr.mxu0 0.0
  %1965 = vmatpush2.msra.mxu0 0.0
  %1966 = vmatprep.subr.mxu0 0.0
  %1967 = vmatpush2.msra.mxu0 0.0
  %1968 = vmatprep.subr.mxu0 0.0
  %1969 = vmatpush2.msra.mxu0 0.0
  %1970 = vmatprep.subr.mxu0 0.0
  %1971 = vmatpush2.msra.mxu0 0.0
  %1972 = vmatprep.mubr.f32.mxu0 0.0
  %1973 = vmatmul.mubr.f32.gmra.mxu0 %v1835
  %v1974 = vpop.f32.mrf.mxu0
  %v1975 = vadd.f32 %v1831, %v1974
  %v1976 = vpop.f32.mrf.mxu0
  %v1977 = vadd.f32 %v1831, %v1976
  %1978 = vdwg.mxu0
  %1979 = vst [vmem:[%s5] sm:$0xff] %v1904
  %1980 = vst [vmem:[%s5 + $0x8] sm:$0xff] %v1906
  %s1981 = scalar_lea.vmem %s5, 16
  %1982 = vst [vmem:[%s1981] sm:$0xff] %v1975
  %1983 = vst [vmem:[%s1981 + $0x8] sm:$0xff] %v1977
  // Predicated region
  $region22: #{nocs_head_forward.1} parent=0 // pred_check
    _
  $region23: #{nocs_head_forward.1} parent=0 // pred_check_branch
    %1985 = sbr.rel (0) target = $region25
  $region24: #{nocs_head_forward.1} parent=0 // pred_region
    _
  $region25: #{nocs_head_forward.1} parent=0 // pred_fallthru
    _
  // Predicated region
  $region26: #{nocs_head_forward.1} parent=0 // pred_check
    _
  $region27: #{nocs_head_forward.1} parent=0 // pred_check_branch
    %1987 = sbr.rel (0) target = $region29
  $region28: #{nocs_head_forward.1} parent=0 // pred_region
    _
  $region29: #{nocs_head_forward.1} parent=0 // pred_fallthru
    _

</llo_original>
